<compile_context>
chip_gen: v7x
topology: tpu7x:2x2x1
jax: 0.10.0
libtpu: 0.0.40
codegen_flags: <defaults>
</compile_context>

<pallas_src>
import functools
import math

import jax
import jax.numpy as jnp
from jax import lax
from jax.experimental import pallas as pl
from jax.experimental.pallas import tpu as pltpu

_NEG = -1e30  # finite "-inf" for masking (avoids inf/NaN propagation)


# ------------------------------ tiling helpers ------------------------------

def _row_tile(n: int) -> int:
    """Largest sublane-aligned tile that divides n (else the full extent)."""
    for t in (512, 256, 128, 64, 32, 16, 8):
        if n % t == 0:
            return t
    return n


def _col_tile(n: int) -> int:
    """Column (lane-axis) tile: multiple of 128 dividing n, else full extent."""
    for t in (1024, 512, 256, 128):
        if n % t == 0:
            return t
    return n


# ------------------------------- linear kernel ------------------------------

def _linear_kernel(x_ref, w_ref, b_ref, o_ref):
    acc = lax.dot_general(
        x_ref[...], w_ref[...],
        dimension_numbers=(((1,), (0,)), ((), ())),
        preferred_element_type=jnp.float32,
    )
    o_ref[...] = (acc + b_ref[...].astype(jnp.float32)).astype(o_ref.dtype)


def linear(x, w, b):
    n, k = x.shape
    f = w.shape[1]
    tm = _row_tile(n)
    return pl.pallas_call(
        _linear_kernel,
        out_shape=jax.ShapeDtypeStruct((n, f), x.dtype),
        grid_spec=pltpu.PrefetchScalarGridSpec(
            num_scalar_prefetch=0,
            grid=(n // tm,),
            in_specs=[
                pl.BlockSpec((tm, k), lambda i: (i, 0)),
                pl.BlockSpec((k, f), lambda i: (0, 0)),
                pl.BlockSpec((1, f), lambda i: (0, 0)),
            ],
            out_specs=pl.BlockSpec((tm, f), lambda i: (i, 0)),
        ),
        compiler_params=pltpu.CompilerParams(
            dimension_semantics=("parallel",),
        ),
    )(x, w, b.reshape(1, f))


# -------------------- masked (graph) attention, flash-style ------------------

def _masked_attn_kernel(q_ref, k_ref, v_ref, adj_ref, o_ref,
                        m_sc, l_sc, acc_sc, *, scale):
    j = pl.program_id(1)

    @pl.when(j == 0)
    def _():
        m_sc[...] = jnp.full_like(m_sc, _NEG)
        l_sc[...] = jnp.zeros_like(l_sc)
        acc_sc[...] = jnp.zeros_like(acc_sc)

    # Fold 1/sqrt(C) into the small q operand instead of scaling the (TM, TK)
    # score tile.
    q = q_ref[...] * scale
    s = lax.dot_general(
        q, k_ref[...],
        dimension_numbers=(((1,), (1,)), ((), ())),
        preferred_element_type=jnp.float32,
    )
    adj = adj_ref[...].astype(jnp.float32)      # edge multiplicity (0 = no edge)
    s = jnp.where(adj > 0.0, s, _NEG)

    m_prev = m_sc[...]
    m_new = jnp.maximum(m_prev, jnp.max(s, axis=1, keepdims=True))
    corr = jnp.exp(m_prev - m_new)
    # Weighting by the edge count both zeroes out non-edges exactly and
    # reproduces torch_geometric's per-edge softmax for duplicated edges.
    p = jnp.exp(s - m_new) * adj
    l_sc[...] = corr * l_sc[...] + jnp.sum(p, axis=1, keepdims=True)
    acc_sc[...] = corr * acc_sc[...] + lax.dot_general(
        p.astype(v_ref.dtype), v_ref[...],
        dimension_numbers=(((1,), (0,)), ((), ())),
        preferred_element_type=jnp.float32,
    )
    m_sc[...] = m_new

    @pl.when(j == pl.num_programs(1) - 1)
    def _():
        l = l_sc[...]
        denom = jnp.where(l > 0.0, l, 1.0)      # nodes with no in-edges -> 0
        o_ref[...] = (acc_sc[...] / denom).astype(o_ref.dtype)


def masked_attention(q, k, v, adj):
    n, c = q.shape
    tm = _row_tile(n)
    tk = _col_tile(n)
    kernel = functools.partial(_masked_attn_kernel, scale=1.0 / math.sqrt(c))
    return pl.pallas_call(
        kernel,
        out_shape=jax.ShapeDtypeStruct((n, c), q.dtype),
        grid_spec=pltpu.PrefetchScalarGridSpec(
            num_scalar_prefetch=0,
            grid=(n // tm, n // tk),
            in_specs=[
                pl.BlockSpec((tm, c), lambda i, j: (i, 0)),
                pl.BlockSpec((tk, c), lambda i, j: (j, 0)),
                pl.BlockSpec((tk, c), lambda i, j: (j, 0)),
                pl.BlockSpec((tm, tk), lambda i, j: (i, j)),
            ],
            out_specs=pl.BlockSpec((tm, c), lambda i, j: (i, 0)),
            scratch_shapes=[
                pltpu.VMEM((tm, 1), jnp.float32),   # running max
                pltpu.VMEM((tm, 1), jnp.float32),   # running sum-exp
                pltpu.VMEM((tm, c), jnp.float32),   # running weighted-V acc
            ],
        ),
        compiler_params=pltpu.CompilerParams(
            dimension_semantics=("parallel", "arbitrary"),
        ),
    )(q, k, v, adj)


# --------------------------- beta gate (+ fused ELU) -------------------------

def _beta_gate_kernel(attn_ref, skip_ref, wb_ref, o_ref, *, apply_elu):
    a = attn_ref[...].astype(jnp.float32)
    r = skip_ref[...].astype(jnp.float32)
    wb = wb_ref[...].astype(jnp.float32)            # (3, C)
    g = jnp.sum(a * wb[0:1, :] + r * wb[1:2, :] + (a - r) * wb[2:3, :],
                axis=-1, keepdims=True)
    beta = 1.0 / (1.0 + jnp.exp(-g))
    out = beta * r + (1.0 - beta) * a
    if apply_elu:                                    # F.elu, alpha = 1
        out = jnp.where(out > 0.0, out, jnp.exp(jnp.minimum(out, 0.0)) - 1.0)
    o_ref[...] = out.astype(o_ref.dtype)


def beta_gate(attn, skip, w_beta, *, apply_elu):
    n, c = attn.shape
    tm = _row_tile(n)
    kernel = functools.partial(_beta_gate_kernel, apply_elu=apply_elu)
    return pl.pallas_call(
        kernel,
        out_shape=jax.ShapeDtypeStruct((n, c), attn.dtype),
        grid_spec=pltpu.PrefetchScalarGridSpec(
            num_scalar_prefetch=0,
            grid=(n // tm,),
            in_specs=[
                pl.BlockSpec((tm, c), lambda i: (i, 0)),
                pl.BlockSpec((tm, c), lambda i: (i, 0)),
                pl.BlockSpec((3, c), lambda i: (0, 0)),
            ],
            out_specs=pl.BlockSpec((tm, c), lambda i: (i, 0)),
        ),
        compiler_params=pltpu.CompilerParams(
            dimension_semantics=("parallel",),
        ),
    )(attn, skip, w_beta)


# --------------------------- TransformerConv / model -------------------------

def transformer_conv(x, adj, p, *, apply_elu):
    c = p["w_beta"].shape[1]
    proj = linear(x, p["w_qkvs"], p["b_qkvs"])       # (N, 4C): [q | k | v | skip]
    q = proj[:, 0 * c:1 * c]
    k = proj[:, 1 * c:2 * c]
    v = proj[:, 2 * c:3 * c]
    skip = proj[:, 3 * c:4 * c]
    # TODO(synk): dropout(p=0.1) on attention coefficients is train-only
    # randomness; eval semantics (identity) are implemented here.
    attn = masked_attention(q, k, v, adj)
    return beta_gate(attn, skip, p["w_beta"], apply_elu=apply_elu)


def trans_img2_forward(params, features, img_feat, adj):
    h1 = transformer_conv(features, adj, params["conv1"], apply_elu=True)
    h2 = transformer_conv(h1, adj, params["conv2"], apply_elu=False)
    h3 = transformer_conv(h2, adj, params["conv3"], apply_elu=True)
    h4 = transformer_conv(h3, adj, params["conv4"], apply_elu=False)

    img1 = transformer_conv(img_feat, adj, params["imgconv1"], apply_elu=True)
    img2 = transformer_conv(img1, adj, params["imgconv2"], apply_elu=False)
    img3 = transformer_conv(img2, adj, params["imgconv3"], apply_elu=True)
    img4 = transformer_conv(img3, adj, params["imgconv4"], apply_elu=False)

    concat = jnp.concatenate([h2, img2], axis=1)     # wrapper glue (torch.cat)
    comb = transformer_conv(concat, adj, params["neck"], apply_elu=True)
    c2 = transformer_conv(comb, adj, params["neck2"], apply_elu=False)
    c3 = transformer_conv(c2, adj, params["c3"], apply_elu=True)
    c4 = transformer_conv(c3, adj, params["c4"], apply_elu=False)
    return h2, img2, c2, h4, img4, c4


# ------------------------------ pure-JAX reference ---------------------------

def _conv_ref(x, adj, p):
    hp = lax.Precision.HIGHEST
    q = jnp.dot(x, p["wq"], precision=hp) + p["bq"]
    k = jnp.dot(x, p["wk"], precision=hp) + p["bk"]
    v = jnp.dot(x, p["wv"], precision=hp) + p["bv"]
    r = jnp.dot(x, p["ws"], precision=hp) + p["bs"]
    c = q.shape[1]
    s = jnp.dot(q, k.T, precision=hp) / math.sqrt(c)
    s = jnp.where(adj > 0.0, s, _NEG)
    m = jnp.max(s, axis=1, keepdims=True)
    e = jnp.exp(s - m) * adj
    denom = jnp.sum(e, axis=1, keepdims=True)
    attn = jnp.dot(e, v, precision=hp) / jnp.where(denom > 0.0, denom, 1.0)
    g = jnp.dot(jnp.concatenate([attn, r, attn - r], axis=-1),
                p["w_beta"].reshape(-1), precision=hp)[:, None]
    beta = 1.0 / (1.0 + jnp.exp(-g))
    return beta * r + (1.0 - beta) * attn


def _elu_ref(x):
    return jnp.where(x > 0.0, x, jnp.exp(jnp.minimum(x, 0.0)) - 1.0)


def _forward_ref(params, features, img_feat, adj):
    h1 = _elu_ref(_conv_ref(features, adj, params["conv1"]))
    h2 = _conv_ref(h1, adj, params["conv2"])
    h3 = _elu_ref(_conv_ref(h2, adj, params["conv3"]))
    h4 = _conv_ref(h3, adj, params["conv4"])
    img1 = _elu_ref(_conv_ref(img_feat, adj, params["imgconv1"]))
    img2 = _conv_ref(img1, adj, params["imgconv2"])
    img3 = _elu_ref(_conv_ref(img2, adj, params["imgconv3"]))
    img4 = _conv_ref(img3, adj, params["imgconv4"])
    concat = jnp.concatenate([h2, img2], axis=1)
    comb = _elu_ref(_conv_ref(concat, adj, params["neck"]))
    c2 = _conv_ref(comb, adj, params["neck2"])
    c3 = _elu_ref(_conv_ref(c2, adj, params["c3"]))
    c4 = _conv_ref(c3, adj, params["c4"])
    return h2, img2, c2, h4, img4, c4


# --------------------------------- params init -------------------------------

def _init_conv(key, in_dim, out_dim):
    ks = jax.random.split(key, 9)
    s = 1.0 / math.sqrt(in_dim)
    wq = jax.random.normal(ks[0], (in_dim, out_dim), jnp.float32) * s
    wk = jax.random.normal(ks[1], (in_dim, out_dim), jnp.float32) * s
    wv = jax.random.normal(ks[2], (in_dim, out_dim), jnp.float32) * s
    ws = jax.random.normal(ks[3], (in_dim, out_dim), jnp.float32) * s
    bq = jax.random.normal(ks[4], (out_dim,), jnp.float32) * 0.1
    bk = jax.random.normal(ks[5], (out_dim,), jnp.float32) * 0.1
    bv = jax.random.normal(ks[6], (out_dim,), jnp.float32) * 0.1
    bs = jax.random.normal(ks[7], (out_dim,), jnp.float32) * 0.1
    wb = jax.random.normal(ks[8], (3, out_dim), jnp.float32) / math.sqrt(3 * out_dim)
    return {
        "w_qkvs": jnp.concatenate([wq, wk, wv, ws], axis=1),
        "b_qkvs": jnp.concatenate([bq, bk, bv, bs], axis=0),
        "w_beta": wb,
        # unfused copies used only by the pure-JAX reference
        "wq": wq, "wk": wk, "wv": wv, "ws": ws,
        "bq": bq, "bk": bk, "bv": bv, "bs": bs,
    }


def init_params(key, hidden_dims):
    in_dim, img_dim, num_hidden, out_dim = hidden_dims
    layer_dims = {
        "conv1": (in_dim, num_hidden),
        "conv2": (num_hidden, out_dim),
        "conv3": (out_dim, num_hidden),
        "conv4": (num_hidden, in_dim),
        "imgconv1": (img_dim, num_hidden),
        "imgconv2": (num_hidden, out_dim),
        "imgconv3": (out_dim, num_hidden),
        "imgconv4": (num_hidden, img_dim),
        "neck": (out_dim * 2, out_dim),
        "neck2": (out_dim, out_dim),
        "c3": (out_dim, num_hidden),
        "c4": (num_hidden, in_dim),
    }
    keys = jax.random.split(key, len(layer_dims))
    return {name: _init_conv(k, di, do)
            for k, (name, (di, do)) in zip(keys, layer_dims.items())}


# ------------------------------------ demo -----------------------------------

if __name__ == "__main__":
    hidden_dims = [32, 16, 32, 16]          # [in_dim, img_dim, num_hidden, out_dim]
    n_nodes, n_edges = 16, 48

    key = jax.random.PRNGKey(0)
    k_par, k_feat, k_img, k_src, k_dst = jax.random.split(key, 5)

    params = init_params(k_par, hidden_dims)
    features = jax.random.normal(k_feat, (n_nodes, hidden_dims[0]), jnp.float32)
    img_feat = jax.random.normal(k_img, (n_nodes, hidden_dims[1]), jnp.float32)

    src = jax.random.randint(k_src, (n_edges,), 0, n_nodes)
    dst = jax.random.randint(k_dst, (n_edges,), 0, n_nodes)
    edge_index = jnp.stack([src, dst], axis=0)        # (2, E): row0=src, row1=dst

    # Dense edge-count matrix: adj[i, j] = #edges j -> i (wrapper glue; the
    # attention kernel only ever holds (TM, TK) tiles of it in VMEM).
    adj = jnp.zeros((n_nodes, n_nodes), jnp.float32).at[
        edge_index[1], edge_index[0]].add(1.0)

    fwd = jax.jit(trans_img2_forward)
    outs = jax.block_until_ready(fwd(params, features, img_feat, adj))
    refs = jax.block_until_ready(_forward_ref(params, features, img_feat, adj))

    names = ("h2", "img2", "c2", "h4", "img4", "c4")
    for name, o, r in zip(names, outs, refs):
        assert o.shape == r.shape, (name, o.shape, r.shape)
        assert jnp.allclose(o, r, rtol=1e-3, atol=1e-4), (
            name, float(jnp.max(jnp.abs(o - r))))

    print("KERNEL_OK")
</pallas_src>

<mosaic_0001>
module attributes {stable_mosaic.version = 11 : i64} {
  func.func @_linear_kernel(%arg0: i32, %arg1: memref<16x32xf32, #tpu.memory_space<vmem>>, %arg2: memref<32x128xf32, #tpu.memory_space<vmem>>, %arg3: memref<1x128xf32, #tpu.memory_space<vmem>>, %arg4: memref<16x128xf32, #tpu.memory_space<vmem>>) attributes {dimension_semantics = [#tpu.dimension_semantics<parallel>], iteration_bounds = array<i64: 1>, scalar_prefetch = 0 : i64, scratch_operands = 0 : i64, tpu.core_type = #tpu.core_type<tc>, window_params = [{transform_indices = @transform_0, window_bounds = array<i64: 16, 32>}, {pipeline_mode = #tpu.pipeline_mode<synchronous>, transform_indices = @transform_1, window_bounds = array<i64: 32, 128>}, {pipeline_mode = #tpu.pipeline_mode<synchronous>, transform_indices = @transform_2, window_bounds = array<i64: 1, 128>}, {transform_indices = @transform_3, window_bounds = array<i64: 16, 128>}]} {
    %c0 = arith.constant 0 : index
    %c0_0 = arith.constant 0 : index
    %0 = vector.load %arg1[%c0, %c0_0] : memref<16x32xf32, #tpu.memory_space<vmem>>, vector<16x32xf32>
    %c0_1 = arith.constant 0 : index
    %c0_2 = arith.constant 0 : index
    %1 = vector.load %arg2[%c0_1, %c0_2] : memref<32x128xf32, #tpu.memory_space<vmem>>, vector<32x128xf32>
    %cst = arith.constant dense<0.000000e+00> : vector<16x128xf32>
    %2 = tpu.matmul %0, %1, %cst {dimension_numbers = #tpu.dot_dimension_numbers<[1], [0], [0], [1], [0, 0, 1, 1], [], []>} : vector<16x32xf32>, vector<32x128xf32>, vector<16x128xf32> -> vector<16x128xf32>
    %c0_3 = arith.constant 0 : index
    %c0_4 = arith.constant 0 : index
    %3 = vector.load %arg3[%c0_3, %c0_4] : memref<1x128xf32, #tpu.memory_space<vmem>>, vector<1x128xf32>
    %4 = vector.broadcast %3 : vector<1x128xf32> to vector<16x128xf32>
    %5 = arith.addf %2, %4 : vector<16x128xf32>
    %c0_5 = arith.constant 0 : index
    %c0_6 = arith.constant 0 : index
    %6 = vector.load %arg4[%c0_5, %c0_6] : memref<16x128xf32, #tpu.memory_space<vmem>>, vector<16x128xf32>
    tpu.vector_store %arg4[%c0_5, %c0_6], %5 {strides = array<i32>} : memref<16x128xf32, #tpu.memory_space<vmem>>, vector<16x128xf32>,
    return
  }
  func.func @transform_0(%arg0: i32) -> (i32, i32) {
    %c0_i32 = arith.constant 0 : i32
    %c0_i32_0 = arith.constant 0 : i32
    return %arg0, %c0_i32 : i32, i32
  }
  func.func @transform_1(%arg0: i32) -> (i32, i32) {
    %c0_i32 = arith.constant 0 : i32
    %c0_i32_0 = arith.constant 0 : i32
    %c0_i32_1 = arith.constant 0 : i32
    return %c0_i32, %c0_i32_0 : i32, i32
  }
  func.func @transform_2(%arg0: i32) -> (i32, i32) {
    %c0_i32 = arith.constant 0 : i32
    %c0_i32_0 = arith.constant 0 : i32
    %c0_i32_1 = arith.constant 0 : i32
    return %c0_i32, %c0_i32_0 : i32, i32
  }
  func.func @transform_3(%arg0: i32) -> (i32, i32) {
    %c0_i32 = arith.constant 0 : i32
    %c0_i32_0 = arith.constant 0 : i32
    return %arg0, %c0_i32 : i32, i32
  }
}

module attributes {stable_mosaic.version = 11 : i64} {
  func.func @_masked_attn_kernel(%arg0: i32, %arg1: i32, %arg2: memref<16x32xf32, #tpu.memory_space<vmem>>, %arg3: memref<16x32xf32, #tpu.memory_space<vmem>>, %arg4: memref<16x32xf32, #tpu.memory_space<vmem>>, %arg5: memref<16x16xf32, #tpu.memory_space<vmem>>, %arg6: memref<16x32xf32, #tpu.memory_space<vmem>>, %arg7: memref<16x1xf32, #tpu.memory_space<vmem>>, %arg8: memref<16x1xf32, #tpu.memory_space<vmem>>, %arg9: memref<16x32xf32, #tpu.memory_space<vmem>>) attributes {dimension_semantics = [#tpu.dimension_semantics<parallel>, #tpu.dimension_semantics<arbitrary>], iteration_bounds = array<i64: 1, 1>, scalar_prefetch = 0 : i64, scratch_operands = 3 : i64, tpu.core_type = #tpu.core_type<tc>, window_params = [{transform_indices = @transform_0, window_bounds = array<i64: 16, 32>}, {transform_indices = @transform_1, window_bounds = array<i64: 16, 32>}, {transform_indices = @transform_2, window_bounds = array<i64: 16, 32>}, {transform_indices = @transform_3, window_bounds = array<i64: 16, 16>}, {transform_indices = @transform_4, window_bounds = array<i64: 16, 32>}]} {
    %c0_i32 = arith.constant 0 : i32
    %0 = arith.cmpi eq, %arg1, %c0_i32 : i32
    %1 = arith.extui %0 : i1 to i32
    %c0_i32_0 = arith.constant 0 : i32
    %2 = arith.cmpi ne, %1, %c0_i32_0 : i32
    scf.if %2 {
      %cst_28 = arith.constant -1.000000e+30 : f32
      %40 = vector.broadcast %cst_28 : f32 to vector<16x1xf32>
      %c0_29 = arith.constant 0 : index
      %c0_30 = arith.constant 0 : index
      %41 = vector.load %arg7[%c0_29, %c0_30] : memref<16x1xf32, #tpu.memory_space<vmem>>, vector<16x1xf32>
      tpu.vector_store %arg7[%c0_29, %c0_30], %40 {strides = array<i32>} : memref<16x1xf32, #tpu.memory_space<vmem>>, vector<16x1xf32>,
      %cst_31 = arith.constant 0.000000e+00 : f32
      %42 = vector.broadcast %cst_31 : f32 to vector<16x1xf32>
      %c0_32 = arith.constant 0 : index
      %c0_33 = arith.constant 0 : index
      %43 = vector.load %arg8[%c0_32, %c0_33] : memref<16x1xf32, #tpu.memory_space<vmem>>, vector<16x1xf32>
      tpu.vector_store %arg8[%c0_32, %c0_33], %42 {strides = array<i32>} : memref<16x1xf32, #tpu.memory_space<vmem>>, vector<16x1xf32>,
      %cst_34 = arith.constant 0.000000e+00 : f32
      %44 = vector.broadcast %cst_34 : f32 to vector<16x32xf32>
      %c0_35 = arith.constant 0 : index
      %c0_36 = arith.constant 0 : index
      %45 = vector.load %arg9[%c0_35, %c0_36] : memref<16x32xf32, #tpu.memory_space<vmem>>, vector<16x32xf32>
      tpu.vector_store %arg9[%c0_35, %c0_36], %44 {strides = array<i32>} : memref<16x32xf32, #tpu.memory_space<vmem>>, vector<16x32xf32>,
    } else {
    }
    %c0 = arith.constant 0 : index
    %c0_1 = arith.constant 0 : index
    %3 = vector.load %arg2[%c0, %c0_1] : memref<16x32xf32, #tpu.memory_space<vmem>>, vector<16x32xf32>
    %cst = arith.constant 0.176776692 : f32
    %4 = vector.broadcast %cst : f32 to vector<16x32xf32>
    %5 = arith.mulf %3, %4 : vector<16x32xf32>
    %c0_2 = arith.constant 0 : index
    %c0_3 = arith.constant 0 : index
    %6 = vector.load %arg3[%c0_2, %c0_3] : memref<16x32xf32, #tpu.memory_space<vmem>>, vector<16x32xf32>
    %cst_4 = arith.constant dense<0.000000e+00> : vector<16x16xf32>
    %7 = tpu.matmul %5, %6, %cst_4 {dimension_numbers = #tpu.dot_dimension_numbers<[1], [1], [0], [0], [0, 0, 1, 0], [], []>} : vector<16x32xf32>, vector<16x32xf32>, vector<16x16xf32> -> vector<16x16xf32>
    %c0_5 = arith.constant 0 : index
    %c0_6 = arith.constant 0 : index
    %8 = vector.load %arg5[%c0_5, %c0_6] : memref<16x16xf32, #tpu.memory_space<vmem>>, vector<16x16xf32>
    %cst_7 = arith.constant 0.000000e+00 : f32
    %9 = vector.broadcast %cst_7 : f32 to vector<16x16xf32>
    %10 = arith.cmpf ogt, %8, %9 : vector<16x16xf32>
    %cst_8 = arith.constant -1.000000e+30 : f32
    %11 = vector.broadcast %cst_8 : f32 to vector<16x16xf32>
    %12 = arith.select %10, %7, %11 : vector<16x16xi1>, vector<16x16xf32>
    %c0_9 = arith.constant 0 : index
    %c0_10 = arith.constant 0 : index
    %13 = vector.load %arg7[%c0_9, %c0_10] : memref<16x1xf32, #tpu.memory_space<vmem>>, vector<16x1xf32>
    %cst_11 = arith.constant dense<0xFF800000> : vector<16xf32>
    %14 = vector.multi_reduction <maximumf>, %12, %cst_11 [1] : vector<16x16xf32> to vector<16xf32>
    %15 = vector.shape_cast %14 : vector<16xf32> to vector<16x1xf32>
    %16 = arith.maximumf %13, %15 : vector<16x1xf32>
    %17 = arith.subf %13, %16 : vector<16x1xf32>
    %18 = math.exp %17 : vector<16x1xf32>
    %19 = vector.broadcast %16 : vector<16x1xf32> to vector<16x16xf32>
    %20 = arith.subf %12, %19 : vector<16x16xf32>
    %21 = math.exp %20 : vector<16x16xf32>
    %22 = arith.mulf %21, %8 : vector<16x16xf32>
    %c0_12 = arith.constant 0 : index
    %c0_13 = arith.constant 0 : index
    %23 = vector.load %arg8[%c0_12, %c0_13] : memref<16x1xf32, #tpu.memory_space<vmem>>, vector<16x1xf32>
    %24 = arith.mulf %18, %23 : vector<16x1xf32>
    %cst_14 = arith.constant dense<0.000000e+00> : vector<16xf32>
    %25 = vector.multi_reduction <add>, %22, %cst_14 [1] : vector<16x16xf32> to vector<16xf32>
    %26 = vector.shape_cast %25 : vector<16xf32> to vector<16x1xf32>
    %27 = arith.addf %24, %26 : vector<16x1xf32>
    %c0_15 = arith.constant 0 : index
    %c0_16 = arith.constant 0 : index
    %28 = vector.load %arg8[%c0_15, %c0_16] : memref<16x1xf32, #tpu.memory_space<vmem>>, vector<16x1xf32>
    tpu.vector_store %arg8[%c0_15, %c0_16], %27 {strides = array<i32>} : memref<16x1xf32, #tpu.memory_space<vmem>>, vector<16x1xf32>,
    %c0_17 = arith.constant 0 : index
    %c0_18 = arith.constant 0 : index
    %29 = vector.load %arg9[%c0_17, %c0_18] : memref<16x32xf32, #tpu.memory_space<vmem>>, vector<16x32xf32>
    %30 = vector.broadcast %18 : vector<16x1xf32> to vector<16x32xf32>
    %31 = arith.mulf %30, %29 : vector<16x32xf32>
    %c0_19 = arith.constant 0 : index
    %c0_20 = arith.constant 0 : index
    %32 = vector.load %arg4[%c0_19, %c0_20] : memref<16x32xf32, #tpu.memory_space<vmem>>, vector<16x32xf32>
    %cst_21 = arith.constant dense<0.000000e+00> : vector<16x32xf32>
    %33 = tpu.matmul %22, %32, %cst_21 {dimension_numbers = #tpu.dot_dimension_numbers<[1], [0], [0], [1], [0, 0, 1, 1], [], []>} : vector<16x16xf32>, vector<16x32xf32>, vector<16x32xf32> -> vector<16x32xf32>
    %34 = arith.addf %31, %33 : vector<16x32xf32>
    %c0_22 = arith.constant 0 : index
    %c0_23 = arith.constant 0 : index
    %35 = vector.load %arg9[%c0_22, %c0_23] : memref<16x32xf32, #tpu.memory_space<vmem>>, vector<16x32xf32>
    tpu.vector_store %arg9[%c0_22, %c0_23], %34 {strides = array<i32>} : memref<16x32xf32, #tpu.memory_space<vmem>>, vector<16x32xf32>,
    %c0_24 = arith.constant 0 : index
    %c0_25 = arith.constant 0 : index
    %36 = vector.load %arg7[%c0_24, %c0_25] : memref<16x1xf32, #tpu.memory_space<vmem>>, vector<16x1xf32>
    tpu.vector_store %arg7[%c0_24, %c0_25], %16 {strides = array<i32>} : memref<16x1xf32, #tpu.memory_space<vmem>>, vector<16x1xf32>,
    %c0_i32_26 = arith.constant 0 : i32
    %37 = arith.cmpi eq, %arg1, %c0_i32_26 : i32
    %38 = arith.extui %37 : i1 to i32
    %c0_i32_27 = arith.constant 0 : i32
    %39 = arith.cmpi ne, %38, %c0_i32_27 : i32
    scf.if %39 {
      %c0_28 = arith.constant 0 : index
      %c0_29 = arith.constant 0 : index
      %40 = vector.load %arg8[%c0_28, %c0_29] : memref<16x1xf32, #tpu.memory_space<vmem>>, vector<16x1xf32>
      %cst_30 = arith.constant 0.000000e+00 : f32
      %41 = vector.broadcast %cst_30 : f32 to vector<16x1xf32>
      %42 = arith.cmpf ogt, %40, %41 : vector<16x1xf32>
      %cst_31 = arith.constant 1.000000e+00 : f32
      %43 = vector.broadcast %cst_31 : f32 to vector<16x1xf32>
      %44 = arith.select %42, %40, %43 : vector<16x1xi1>, vector<16x1xf32>
      %c0_32 = arith.constant 0 : index
      %c0_33 = arith.constant 0 : index
      %45 = vector.load %arg9[%c0_32, %c0_33] : memref<16x32xf32, #tpu.memory_space<vmem>>, vector<16x32xf32>
      %46 = vector.broadcast %44 : vector<16x1xf32> to vector<16x32xf32>
      %47 = arith.divf %45, %46 : vector<16x32xf32>
      %c0_34 = arith.constant 0 : index
      %c0_35 = arith.constant 0 : index
      %48 = vector.load %arg6[%c0_34, %c0_35] : memref<16x32xf32, #tpu.memory_space<vmem>>, vector<16x32xf32>
      tpu.vector_store %arg6[%c0_34, %c0_35], %47 {strides = array<i32>} : memref<16x32xf32, #tpu.memory_space<vmem>>, vector<16x32xf32>,
    } else {
    }
    return
  }
  func.func @transform_0(%arg0: i32, %arg1: i32) -> (i32, i32) {
    %c0_i32 = arith.constant 0 : i32
    %c0_i32_0 = arith.constant 0 : i32
    return %arg0, %c0_i32 : i32, i32
  }
  func.func @transform_1(%arg0: i32, %arg1: i32) -> (i32, i32) {
    %c0_i32 = arith.constant 0 : i32
    %c0_i32_0 = arith.constant 0 : i32
    return %arg1, %c0_i32 : i32, i32
  }
  func.func @transform_2(%arg0: i32, %arg1: i32) -> (i32, i32) {
    %c0_i32 = arith.constant 0 : i32
    %c0_i32_0 = arith.constant 0 : i32
    return %arg1, %c0_i32 : i32, i32
  }
  func.func @transform_3(%arg0: i32, %arg1: i32) -> (i32, i32) {
    %c0_i32 = arith.constant 0 : i32
    return %arg0, %arg1 : i32, i32
  }
  func.func @transform_4(%arg0: i32, %arg1: i32) -> (i32, i32) {
    %c0_i32 = arith.constant 0 : i32
    %c0_i32_0 = arith.constant 0 : i32
    return %arg0, %c0_i32 : i32, i32
  }
}

module attributes {stable_mosaic.version = 11 : i64} {
  func.func @_linear_kernel(%arg0: i32, %arg1: memref<16x16xf32, #tpu.memory_space<vmem>>, %arg2: memref<16x128xf32, #tpu.memory_space<vmem>>, %arg3: memref<1x128xf32, #tpu.memory_space<vmem>>, %arg4: memref<16x128xf32, #tpu.memory_space<vmem>>) attributes {dimension_semantics = [#tpu.dimension_semantics<parallel>], iteration_bounds = array<i64: 1>, scalar_prefetch = 0 : i64, scratch_operands = 0 : i64, tpu.core_type = #tpu.core_type<tc>, window_params = [{transform_indices = @transform_0, window_bounds = array<i64: 16, 16>}, {pipeline_mode = #tpu.pipeline_mode<synchronous>, transform_indices = @transform_1, window_bounds = array<i64: 16, 128>}, {pipeline_mode = #tpu.pipeline_mode<synchronous>, transform_indices = @transform_2, window_bounds = array<i64: 1, 128>}, {transform_indices = @transform_3, window_bounds = array<i64: 16, 128>}]} {
    %c0 = arith.constant 0 : index
    %c0_0 = arith.constant 0 : index
    %0 = vector.load %arg1[%c0, %c0_0] : memref<16x16xf32, #tpu.memory_space<vmem>>, vector<16x16xf32>
    %c0_1 = arith.constant 0 : index
    %c0_2 = arith.constant 0 : index
    %1 = vector.load %arg2[%c0_1, %c0_2] : memref<16x128xf32, #tpu.memory_space<vmem>>, vector<16x128xf32>
    %cst = arith.constant dense<0.000000e+00> : vector<16x128xf32>
    %2 = tpu.matmul %0, %1, %cst {dimension_numbers = #tpu.dot_dimension_numbers<[1], [0], [0], [1], [0, 0, 1, 1], [], []>} : vector<16x16xf32>, vector<16x128xf32>, vector<16x128xf32> -> vector<16x128xf32>
    %c0_3 = arith.constant 0 : index
    %c0_4 = arith.constant 0 : index
    %3 = vector.load %arg3[%c0_3, %c0_4] : memref<1x128xf32, #tpu.memory_space<vmem>>, vector<1x128xf32>
    %4 = vector.broadcast %3 : vector<1x128xf32> to vector<16x128xf32>
    %5 = arith.addf %2, %4 : vector<16x128xf32>
    %c0_5 = arith.constant 0 : index
    %c0_6 = arith.constant 0 : index
    %6 = vector.load %arg4[%c0_5, %c0_6] : memref<16x128xf32, #tpu.memory_space<vmem>>, vector<16x128xf32>
    tpu.vector_store %arg4[%c0_5, %c0_6], %5 {strides = array<i32>} : memref<16x128xf32, #tpu.memory_space<vmem>>, vector<16x128xf32>,
    return
  }
  func.func @transform_0(%arg0: i32) -> (i32, i32) {
    %c0_i32 = arith.constant 0 : i32
    %c0_i32_0 = arith.constant 0 : i32
    return %arg0, %c0_i32 : i32, i32
  }
  func.func @transform_1(%arg0: i32) -> (i32, i32) {
    %c0_i32 = arith.constant 0 : i32
    %c0_i32_0 = arith.constant 0 : i32
    %c0_i32_1 = arith.constant 0 : i32
    return %c0_i32, %c0_i32_0 : i32, i32
  }
  func.func @transform_2(%arg0: i32) -> (i32, i32) {
    %c0_i32 = arith.constant 0 : i32
    %c0_i32_0 = arith.constant 0 : i32
    %c0_i32_1 = arith.constant 0 : i32
    return %c0_i32, %c0_i32_0 : i32, i32
  }
  func.func @transform_3(%arg0: i32) -> (i32, i32) {
    %c0_i32 = arith.constant 0 : i32
    %c0_i32_0 = arith.constant 0 : i32
    return %arg0, %c0_i32 : i32, i32
  }
}

module attributes {stable_mosaic.version = 11 : i64} {
  func.func @_beta_gate_kernel(%arg0: i32, %arg1: memref<16x32xf32, #tpu.memory_space<vmem>>, %arg2: memref<16x32xf32, #tpu.memory_space<vmem>>, %arg3: memref<3x32xf32, #tpu.memory_space<vmem>>, %arg4: memref<16x32xf32, #tpu.memory_space<vmem>>) attributes {dimension_semantics = [#tpu.dimension_semantics<parallel>], iteration_bounds = array<i64: 1>, scalar_prefetch = 0 : i64, scratch_operands = 0 : i64, tpu.core_type = #tpu.core_type<tc>, window_params = [{transform_indices = @transform_0, window_bounds = array<i64: 16, 32>}, {transform_indices = @transform_1, window_bounds = array<i64: 16, 32>}, {pipeline_mode = #tpu.pipeline_mode<synchronous>, transform_indices = @transform_2, window_bounds = array<i64: 3, 32>}, {transform_indices = @transform_3, window_bounds = array<i64: 16, 32>}]} {
    %c0 = arith.constant 0 : index
    %c0_0 = arith.constant 0 : index
    %0 = vector.load %arg1[%c0, %c0_0] : memref<16x32xf32, #tpu.memory_space<vmem>>, vector<16x32xf32>
    %c0_1 = arith.constant 0 : index
    %c0_2 = arith.constant 0 : index
    %1 = vector.load %arg2[%c0_1, %c0_2] : memref<16x32xf32, #tpu.memory_space<vmem>>, vector<16x32xf32>
    %c0_3 = arith.constant 0 : index
    %c0_4 = arith.constant 0 : index
    %2 = vector.load %arg3[%c0_3, %c0_4] : memref<3x32xf32, #tpu.memory_space<vmem>>, vector<3x32xf32>
    %3 = vector.extract_strided_slice %2 {offsets = [0, 0], sizes = [1, 32], strides = [1, 1]} : vector<3x32xf32> to vector<1x32xf32>
    %4 = vector.broadcast %3 : vector<1x32xf32> to vector<16x32xf32>
    %5 = arith.mulf %0, %4 : vector<16x32xf32>
    %6 = vector.extract_strided_slice %2 {offsets = [1, 0], sizes = [1, 32], strides = [1, 1]} : vector<3x32xf32> to vector<1x32xf32>
    %7 = vector.broadcast %6 : vector<1x32xf32> to vector<16x32xf32>
    %8 = arith.mulf %1, %7 : vector<16x32xf32>
    %9 = arith.addf %5, %8 : vector<16x32xf32>
    %10 = arith.subf %0, %1 : vector<16x32xf32>
    %11 = vector.extract_strided_slice %2 {offsets = [2, 0], sizes = [1, 32], strides = [1, 1]} : vector<3x32xf32> to vector<1x32xf32>
    %12 = vector.broadcast %11 : vector<1x32xf32> to vector<16x32xf32>
    %13 = arith.mulf %10, %12 : vector<16x32xf32>
    %14 = arith.addf %9, %13 : vector<16x32xf32>
    %cst = arith.constant dense<0.000000e+00> : vector<16xf32>
    %15 = vector.multi_reduction <add>, %14, %cst [1] : vector<16x32xf32> to vector<16xf32>
    %16 = vector.shape_cast %15 : vector<16xf32> to vector<16x1xf32>
    %cst_5 = arith.constant 0.000000e+00 : f32
    %17 = vector.broadcast %cst_5 : f32 to vector<16x1xf32>
    %18 = arith.subf %17, %16 : vector<16x1xf32>
    %19 = math.exp %18 : vector<16x1xf32>
    %cst_6 = arith.constant 1.000000e+00 : f32
    %20 = vector.broadcast %cst_6 : f32 to vector<16x1xf32>
    %21 = arith.addf %20, %19 : vector<16x1xf32>
    %cst_7 = arith.constant 1.000000e+00 : f32
    %22 = vector.broadcast %cst_7 : f32 to vector<16x1xf32>
    %23 = arith.divf %22, %21 : vector<16x1xf32>
    %24 = vector.broadcast %23 : vector<16x1xf32> to vector<16x32xf32>
    %25 = arith.mulf %24, %1 : vector<16x32xf32>
    %cst_8 = arith.constant 1.000000e+00 : f32
    %26 = vector.broadcast %cst_8 : f32 to vector<16x1xf32>
    %27 = arith.subf %26, %23 : vector<16x1xf32>
    %28 = vector.broadcast %27 : vector<16x1xf32> to vector<16x32xf32>
    %29 = arith.mulf %28, %0 : vector<16x32xf32>
    %30 = arith.addf %25, %29 : vector<16x32xf32>
    %cst_9 = arith.constant 0.000000e+00 : f32
    %31 = vector.broadcast %cst_9 : f32 to vector<16x32xf32>
    %32 = arith.cmpf ogt, %30, %31 : vector<16x32xf32>
    %cst_10 = arith.constant 0.000000e+00 : f32
    %33 = vector.broadcast %cst_10 : f32 to vector<16x32xf32>
    %34 = arith.minimumf %30, %33 : vector<16x32xf32>
    %35 = math.exp %34 : vector<16x32xf32>
    %cst_11 = arith.constant 1.000000e+00 : f32
    %36 = vector.broadcast %cst_11 : f32 to vector<16x32xf32>
    %37 = arith.subf %35, %36 : vector<16x32xf32>
    %38 = arith.select %32, %30, %37 : vector<16x32xi1>, vector<16x32xf32>
    %c0_12 = arith.constant 0 : index
    %c0_13 = arith.constant 0 : index
    %39 = vector.load %arg4[%c0_12, %c0_13] : memref<16x32xf32, #tpu.memory_space<vmem>>, vector<16x32xf32>
    tpu.vector_store %arg4[%c0_12, %c0_13], %38 {strides = array<i32>} : memref<16x32xf32, #tpu.memory_space<vmem>>, vector<16x32xf32>,
    return
  }
  func.func @transform_0(%arg0: i32) -> (i32, i32) {
    %c0_i32 = arith.constant 0 : i32
    %c0_i32_0 = arith.constant 0 : i32
    return %arg0, %c0_i32 : i32, i32
  }
  func.func @transform_1(%arg0: i32) -> (i32, i32) {
    %c0_i32 = arith.constant 0 : i32
    %c0_i32_0 = arith.constant 0 : i32
    return %arg0, %c0_i32 : i32, i32
  }
  func.func @transform_2(%arg0: i32) -> (i32, i32) {
    %c0_i32 = arith.constant 0 : i32
    %c0_i32_0 = arith.constant 0 : i32
    %c0_i32_1 = arith.constant 0 : i32
    return %c0_i32, %c0_i32_0 : i32, i32
  }
  func.func @transform_3(%arg0: i32) -> (i32, i32) {
    %c0_i32 = arith.constant 0 : i32
    %c0_i32_0 = arith.constant 0 : i32
    return %arg0, %c0_i32 : i32, i32
  }
}

module attributes {stable_mosaic.version = 11 : i64} {
  func.func @_linear_kernel(%arg0: i32, %arg1: memref<16x32xf32, #tpu.memory_space<vmem>>, %arg2: memref<32x64xf32, #tpu.memory_space<vmem>>, %arg3: memref<1x64xf32, #tpu.memory_space<vmem>>, %arg4: memref<16x64xf32, #tpu.memory_space<vmem>>) attributes {dimension_semantics = [#tpu.dimension_semantics<parallel>], iteration_bounds = array<i64: 1>, scalar_prefetch = 0 : i64, scratch_operands = 0 : i64, tpu.core_type = #tpu.core_type<tc>, window_params = [{transform_indices = @transform_0, window_bounds = array<i64: 16, 32>}, {pipeline_mode = #tpu.pipeline_mode<synchronous>, transform_indices = @transform_1, window_bounds = array<i64: 32, 64>}, {pipeline_mode = #tpu.pipeline_mode<synchronous>, transform_indices = @transform_2, window_bounds = array<i64: 1, 64>}, {transform_indices = @transform_3, window_bounds = array<i64: 16, 64>}]} {
    %c0 = arith.constant 0 : index
    %c0_0 = arith.constant 0 : index
    %0 = vector.load %arg1[%c0, %c0_0] : memref<16x32xf32, #tpu.memory_space<vmem>>, vector<16x32xf32>
    %c0_1 = arith.constant 0 : index
    %c0_2 = arith.constant 0 : index
    %1 = vector.load %arg2[%c0_1, %c0_2] : memref<32x64xf32, #tpu.memory_space<vmem>>, vector<32x64xf32>
    %cst = arith.constant dense<0.000000e+00> : vector<16x64xf32>
    %2 = tpu.matmul %0, %1, %cst {dimension_numbers = #tpu.dot_dimension_numbers<[1], [0], [0], [1], [0, 0, 1, 1], [], []>} : vector<16x32xf32>, vector<32x64xf32>, vector<16x64xf32> -> vector<16x64xf32>
    %c0_3 = arith.constant 0 : index
    %c0_4 = arith.constant 0 : index
    %3 = vector.load %arg3[%c0_3, %c0_4] : memref<1x64xf32, #tpu.memory_space<vmem>>, vector<1x64xf32>
    %4 = vector.broadcast %3 : vector<1x64xf32> to vector<16x64xf32>
    %5 = arith.addf %2, %4 : vector<16x64xf32>
    %c0_5 = arith.constant 0 : index
    %c0_6 = arith.constant 0 : index
    %6 = vector.load %arg4[%c0_5, %c0_6] : memref<16x64xf32, #tpu.memory_space<vmem>>, vector<16x64xf32>
    tpu.vector_store %arg4[%c0_5, %c0_6], %5 {strides = array<i32>} : memref<16x64xf32, #tpu.memory_space<vmem>>, vector<16x64xf32>,
    return
  }
  func.func @transform_0(%arg0: i32) -> (i32, i32) {
    %c0_i32 = arith.constant 0 : i32
    %c0_i32_0 = arith.constant 0 : i32
    return %arg0, %c0_i32 : i32, i32
  }
  func.func @transform_1(%arg0: i32) -> (i32, i32) {
    %c0_i32 = arith.constant 0 : i32
    %c0_i32_0 = arith.constant 0 : i32
    %c0_i32_1 = arith.constant 0 : i32
    return %c0_i32, %c0_i32_0 : i32, i32
  }
  func.func @transform_2(%arg0: i32) -> (i32, i32) {
    %c0_i32 = arith.constant 0 : i32
    %c0_i32_0 = arith.constant 0 : i32
    %c0_i32_1 = arith.constant 0 : i32
    return %c0_i32, %c0_i32_0 : i32, i32
  }
  func.func @transform_3(%arg0: i32) -> (i32, i32) {
    %c0_i32 = arith.constant 0 : i32
    %c0_i32_0 = arith.constant 0 : i32
    return %arg0, %c0_i32 : i32, i32
  }
}

module attributes {stable_mosaic.version = 11 : i64} {
  func.func @_beta_gate_kernel(%arg0: i32, %arg1: memref<16x16xf32, #tpu.memory_space<vmem>>, %arg2: memref<16x16xf32, #tpu.memory_space<vmem>>, %arg3: memref<3x16xf32, #tpu.memory_space<vmem>>, %arg4: memref<16x16xf32, #tpu.memory_space<vmem>>) attributes {dimension_semantics = [#tpu.dimension_semantics<parallel>], iteration_bounds = array<i64: 1>, scalar_prefetch = 0 : i64, scratch_operands = 0 : i64, tpu.core_type = #tpu.core_type<tc>, window_params = [{transform_indices = @transform_0, window_bounds = array<i64: 16, 16>}, {transform_indices = @transform_1, window_bounds = array<i64: 16, 16>}, {pipeline_mode = #tpu.pipeline_mode<synchronous>, transform_indices = @transform_2, window_bounds = array<i64: 3, 16>}, {transform_indices = @transform_3, window_bounds = array<i64: 16, 16>}]} {
    %c0 = arith.constant 0 : index
    %c0_0 = arith.constant 0 : index
    %0 = vector.load %arg1[%c0, %c0_0] : memref<16x16xf32, #tpu.memory_space<vmem>>, vector<16x16xf32>
    %c0_1 = arith.constant 0 : index
    %c0_2 = arith.constant 0 : index
    %1 = vector.load %arg2[%c0_1, %c0_2] : memref<16x16xf32, #tpu.memory_space<vmem>>, vector<16x16xf32>
    %c0_3 = arith.constant 0 : index
    %c0_4 = arith.constant 0 : index
    %2 = vector.load %arg3[%c0_3, %c0_4] : memref<3x16xf32, #tpu.memory_space<vmem>>, vector<3x16xf32>
    %3 = vector.extract_strided_slice %2 {offsets = [0, 0], sizes = [1, 16], strides = [1, 1]} : vector<3x16xf32> to vector<1x16xf32>
    %4 = vector.broadcast %3 : vector<1x16xf32> to vector<16x16xf32>
    %5 = arith.mulf %0, %4 : vector<16x16xf32>
    %6 = vector.extract_strided_slice %2 {offsets = [1, 0], sizes = [1, 16], strides = [1, 1]} : vector<3x16xf32> to vector<1x16xf32>
    %7 = vector.broadcast %6 : vector<1x16xf32> to vector<16x16xf32>
    %8 = arith.mulf %1, %7 : vector<16x16xf32>
    %9 = arith.addf %5, %8 : vector<16x16xf32>
    %10 = arith.subf %0, %1 : vector<16x16xf32>
    %11 = vector.extract_strided_slice %2 {offsets = [2, 0], sizes = [1, 16], strides = [1, 1]} : vector<3x16xf32> to vector<1x16xf32>
    %12 = vector.broadcast %11 : vector<1x16xf32> to vector<16x16xf32>
    %13 = arith.mulf %10, %12 : vector<16x16xf32>
    %14 = arith.addf %9, %13 : vector<16x16xf32>
    %cst = arith.constant dense<0.000000e+00> : vector<16xf32>
    %15 = vector.multi_reduction <add>, %14, %cst [1] : vector<16x16xf32> to vector<16xf32>
    %16 = vector.shape_cast %15 : vector<16xf32> to vector<16x1xf32>
    %cst_5 = arith.constant 0.000000e+00 : f32
    %17 = vector.broadcast %cst_5 : f32 to vector<16x1xf32>
    %18 = arith.subf %17, %16 : vector<16x1xf32>
    %19 = math.exp %18 : vector<16x1xf32>
    %cst_6 = arith.constant 1.000000e+00 : f32
    %20 = vector.broadcast %cst_6 : f32 to vector<16x1xf32>
    %21 = arith.addf %20, %19 : vector<16x1xf32>
    %cst_7 = arith.constant 1.000000e+00 : f32
    %22 = vector.broadcast %cst_7 : f32 to vector<16x1xf32>
    %23 = arith.divf %22, %21 : vector<16x1xf32>
    %24 = vector.broadcast %23 : vector<16x1xf32> to vector<16x16xf32>
    %25 = arith.mulf %24, %1 : vector<16x16xf32>
    %cst_8 = arith.constant 1.000000e+00 : f32
    %26 = vector.broadcast %cst_8 : f32 to vector<16x1xf32>
    %27 = arith.subf %26, %23 : vector<16x1xf32>
    %28 = vector.broadcast %27 : vector<16x1xf32> to vector<16x16xf32>
    %29 = arith.mulf %28, %0 : vector<16x16xf32>
    %30 = arith.addf %25, %29 : vector<16x16xf32>
    %c0_9 = arith.constant 0 : index
    %c0_10 = arith.constant 0 : index
    %31 = vector.load %arg4[%c0_9, %c0_10] : memref<16x16xf32, #tpu.memory_space<vmem>>, vector<16x16xf32>
    tpu.vector_store %arg4[%c0_9, %c0_10], %30 {strides = array<i32>} : memref<16x16xf32, #tpu.memory_space<vmem>>, vector<16x16xf32>,
    return
  }
  func.func @transform_0(%arg0: i32) -> (i32, i32) {
    %c0_i32 = arith.constant 0 : i32
    %c0_i32_0 = arith.constant 0 : i32
    return %arg0, %c0_i32 : i32, i32
  }
  func.func @transform_1(%arg0: i32) -> (i32, i32) {
    %c0_i32 = arith.constant 0 : i32
    %c0_i32_0 = arith.constant 0 : i32
    return %arg0, %c0_i32 : i32, i32
  }
  func.func @transform_2(%arg0: i32) -> (i32, i32) {
    %c0_i32 = arith.constant 0 : i32
    %c0_i32_0 = arith.constant 0 : i32
    %c0_i32_1 = arith.constant 0 : i32
    return %c0_i32, %c0_i32_0 : i32, i32
  }
  func.func @transform_3(%arg0: i32) -> (i32, i32) {
    %c0_i32 = arith.constant 0 : i32
    %c0_i32_0 = arith.constant 0 : i32
    return %arg0, %c0_i32 : i32, i32
  }
}

module attributes {stable_mosaic.version = 11 : i64} {
  func.func @_masked_attn_kernel(%arg0: i32, %arg1: i32, %arg2: memref<16x16xf32, #tpu.memory_space<vmem>>, %arg3: memref<16x16xf32, #tpu.memory_space<vmem>>, %arg4: memref<16x16xf32, #tpu.memory_space<vmem>>, %arg5: memref<16x16xf32, #tpu.memory_space<vmem>>, %arg6: memref<16x16xf32, #tpu.memory_space<vmem>>, %arg7: memref<16x1xf32, #tpu.memory_space<vmem>>, %arg8: memref<16x1xf32, #tpu.memory_space<vmem>>, %arg9: memref<16x16xf32, #tpu.memory_space<vmem>>) attributes {dimension_semantics = [#tpu.dimension_semantics<parallel>, #tpu.dimension_semantics<arbitrary>], iteration_bounds = array<i64: 1, 1>, scalar_prefetch = 0 : i64, scratch_operands = 3 : i64, tpu.core_type = #tpu.core_type<tc>, window_params = [{transform_indices = @transform_0, window_bounds = array<i64: 16, 16>}, {transform_indices = @transform_1, window_bounds = array<i64: 16, 16>}, {transform_indices = @transform_2, window_bounds = array<i64: 16, 16>}, {transform_indices = @transform_3, window_bounds = array<i64: 16, 16>}, {transform_indices = @transform_4, window_bounds = array<i64: 16, 16>}]} {
    %c0_i32 = arith.constant 0 : i32
    %0 = arith.cmpi eq, %arg1, %c0_i32 : i32
    %1 = arith.extui %0 : i1 to i32
    %c0_i32_0 = arith.constant 0 : i32
    %2 = arith.cmpi ne, %1, %c0_i32_0 : i32
    scf.if %2 {
      %cst_28 = arith.constant -1.000000e+30 : f32
      %40 = vector.broadcast %cst_28 : f32 to vector<16x1xf32>
      %c0_29 = arith.constant 0 : index
      %c0_30 = arith.constant 0 : index
      %41 = vector.load %arg7[%c0_29, %c0_30] : memref<16x1xf32, #tpu.memory_space<vmem>>, vector<16x1xf32>
      tpu.vector_store %arg7[%c0_29, %c0_30], %40 {strides = array<i32>} : memref<16x1xf32, #tpu.memory_space<vmem>>, vector<16x1xf32>,
      %cst_31 = arith.constant 0.000000e+00 : f32
      %42 = vector.broadcast %cst_31 : f32 to vector<16x1xf32>
      %c0_32 = arith.constant 0 : index
      %c0_33 = arith.constant 0 : index
      %43 = vector.load %arg8[%c0_32, %c0_33] : memref<16x1xf32, #tpu.memory_space<vmem>>, vector<16x1xf32>
      tpu.vector_store %arg8[%c0_32, %c0_33], %42 {strides = array<i32>} : memref<16x1xf32, #tpu.memory_space<vmem>>, vector<16x1xf32>,
      %cst_34 = arith.constant 0.000000e+00 : f32
      %44 = vector.broadcast %cst_34 : f32 to vector<16x16xf32>
      %c0_35 = arith.constant 0 : index
      %c0_36 = arith.constant 0 : index
      %45 = vector.load %arg9[%c0_35, %c0_36] : memref<16x16xf32, #tpu.memory_space<vmem>>, vector<16x16xf32>
      tpu.vector_store %arg9[%c0_35, %c0_36], %44 {strides = array<i32>} : memref<16x16xf32, #tpu.memory_space<vmem>>, vector<16x16xf32>,
    } else {
    }
    %c0 = arith.constant 0 : index
    %c0_1 = arith.constant 0 : index
    %3 = vector.load %arg2[%c0, %c0_1] : memref<16x16xf32, #tpu.memory_space<vmem>>, vector<16x16xf32>
    %cst = arith.constant 2.500000e-01 : f32
    %4 = vector.broadcast %cst : f32 to vector<16x16xf32>
    %5 = arith.mulf %3, %4 : vector<16x16xf32>
    %c0_2 = arith.constant 0 : index
    %c0_3 = arith.constant 0 : index
    %6 = vector.load %arg3[%c0_2, %c0_3] : memref<16x16xf32, #tpu.memory_space<vmem>>, vector<16x16xf32>
    %cst_4 = arith.constant dense<0.000000e+00> : vector<16x16xf32>
    %7 = tpu.matmul %5, %6, %cst_4 {dimension_numbers = #tpu.dot_dimension_numbers<[1], [1], [0], [0], [0, 0, 1, 0], [], []>} : vector<16x16xf32>, vector<16x16xf32>, vector<16x16xf32> -> vector<16x16xf32>
    %c0_5 = arith.constant 0 : index
    %c0_6 = arith.constant 0 : index
    %8 = vector.load %arg5[%c0_5, %c0_6] : memref<16x16xf32, #tpu.memory_space<vmem>>, vector<16x16xf32>
    %cst_7 = arith.constant 0.000000e+00 : f32
    %9 = vector.broadcast %cst_7 : f32 to vector<16x16xf32>
    %10 = arith.cmpf ogt, %8, %9 : vector<16x16xf32>
    %cst_8 = arith.constant -1.000000e+30 : f32
    %11 = vector.broadcast %cst_8 : f32 to vector<16x16xf32>
    %12 = arith.select %10, %7, %11 : vector<16x16xi1>, vector<16x16xf32>
    %c0_9 = arith.constant 0 : index
    %c0_10 = arith.constant 0 : index
    %13 = vector.load %arg7[%c0_9, %c0_10] : memref<16x1xf32, #tpu.memory_space<vmem>>, vector<16x1xf32>
    %cst_11 = arith.constant dense<0xFF800000> : vector<16xf32>
    %14 = vector.multi_reduction <maximumf>, %12, %cst_11 [1] : vector<16x16xf32> to vector<16xf32>
    %15 = vector.shape_cast %14 : vector<16xf32> to vector<16x1xf32>
    %16 = arith.maximumf %13, %15 : vector<16x1xf32>
    %17 = arith.subf %13, %16 : vector<16x1xf32>
    %18 = math.exp %17 : vector<16x1xf32>
    %19 = vector.broadcast %16 : vector<16x1xf32> to vector<16x16xf32>
    %20 = arith.subf %12, %19 : vector<16x16xf32>
    %21 = math.exp %20 : vector<16x16xf32>
    %22 = arith.mulf %21, %8 : vector<16x16xf32>
    %c0_12 = arith.constant 0 : index
    %c0_13 = arith.constant 0 : index
    %23 = vector.load %arg8[%c0_12, %c0_13] : memref<16x1xf32, #tpu.memory_space<vmem>>, vector<16x1xf32>
    %24 = arith.mulf %18, %23 : vector<16x1xf32>
    %cst_14 = arith.constant dense<0.000000e+00> : vector<16xf32>
    %25 = vector.multi_reduction <add>, %22, %cst_14 [1] : vector<16x16xf32> to vector<16xf32>
    %26 = vector.shape_cast %25 : vector<16xf32> to vector<16x1xf32>
    %27 = arith.addf %24, %26 : vector<16x1xf32>
    %c0_15 = arith.constant 0 : index
    %c0_16 = arith.constant 0 : index
    %28 = vector.load %arg8[%c0_15, %c0_16] : memref<16x1xf32, #tpu.memory_space<vmem>>, vector<16x1xf32>
    tpu.vector_store %arg8[%c0_15, %c0_16], %27 {strides = array<i32>} : memref<16x1xf32, #tpu.memory_space<vmem>>, vector<16x1xf32>,
    %c0_17 = arith.constant 0 : index
    %c0_18 = arith.constant 0 : index
    %29 = vector.load %arg9[%c0_17, %c0_18] : memref<16x16xf32, #tpu.memory_space<vmem>>, vector<16x16xf32>
    %30 = vector.broadcast %18 : vector<16x1xf32> to vector<16x16xf32>
    %31 = arith.mulf %30, %29 : vector<16x16xf32>
    %c0_19 = arith.constant 0 : index
    %c0_20 = arith.constant 0 : index
    %32 = vector.load %arg4[%c0_19, %c0_20] : memref<16x16xf32, #tpu.memory_space<vmem>>, vector<16x16xf32>
    %cst_21 = arith.constant dense<0.000000e+00> : vector<16x16xf32>
    %33 = tpu.matmul %22, %32, %cst_21 {dimension_numbers = #tpu.dot_dimension_numbers<[1], [0], [0], [1], [0, 0, 1, 1], [], []>} : vector<16x16xf32>, vector<16x16xf32>, vector<16x16xf32> -> vector<16x16xf32>
    %34 = arith.addf %31, %33 : vector<16x16xf32>
    %c0_22 = arith.constant 0 : index
    %c0_23 = arith.constant 0 : index
    %35 = vector.load %arg9[%c0_22, %c0_23] : memref<16x16xf32, #tpu.memory_space<vmem>>, vector<16x16xf32>
    tpu.vector_store %arg9[%c0_22, %c0_23], %34 {strides = array<i32>} : memref<16x16xf32, #tpu.memory_space<vmem>>, vector<16x16xf32>,
    %c0_24 = arith.constant 0 : index
    %c0_25 = arith.constant 0 : index
    %36 = vector.load %arg7[%c0_24, %c0_25] : memref<16x1xf32, #tpu.memory_space<vmem>>, vector<16x1xf32>
    tpu.vector_store %arg7[%c0_24, %c0_25], %16 {strides = array<i32>} : memref<16x1xf32, #tpu.memory_space<vmem>>, vector<16x1xf32>,
    %c0_i32_26 = arith.constant 0 : i32
    %37 = arith.cmpi eq, %arg1, %c0_i32_26 : i32
    %38 = arith.extui %37 : i1 to i32
    %c0_i32_27 = arith.constant 0 : i32
    %39 = arith.cmpi ne, %38, %c0_i32_27 : i32
    scf.if %39 {
      %c0_28 = arith.constant 0 : index
      %c0_29 = arith.constant 0 : index
      %40 = vector.load %arg8[%c0_28, %c0_29] : memref<16x1xf32, #tpu.memory_space<vmem>>, vector<16x1xf32>
      %cst_30 = arith.constant 0.000000e+00 : f32
      %41 = vector.broadcast %cst_30 : f32 to vector<16x1xf32>
      %42 = arith.cmpf ogt, %40, %41 : vector<16x1xf32>
      %cst_31 = arith.constant 1.000000e+00 : f32
      %43 = vector.broadcast %cst_31 : f32 to vector<16x1xf32>
      %44 = arith.select %42, %40, %43 : vector<16x1xi1>, vector<16x1xf32>
      %c0_32 = arith.constant 0 : index
      %c0_33 = arith.constant 0 : index
      %45 = vector.load %arg9[%c0_32, %c0_33] : memref<16x16xf32, #tpu.memory_space<vmem>>, vector<16x16xf32>
      %46 = vector.broadcast %44 : vector<16x1xf32> to vector<16x16xf32>
      %47 = arith.divf %45, %46 : vector<16x16xf32>
      %c0_34 = arith.constant 0 : index
      %c0_35 = arith.constant 0 : index
      %48 = vector.load %arg6[%c0_34, %c0_35] : memref<16x16xf32, #tpu.memory_space<vmem>>, vector<16x16xf32>
      tpu.vector_store %arg6[%c0_34, %c0_35], %47 {strides = array<i32>} : memref<16x16xf32, #tpu.memory_space<vmem>>, vector<16x16xf32>,
    } else {
    }
    return
  }
  func.func @transform_0(%arg0: i32, %arg1: i32) -> (i32, i32) {
    %c0_i32 = arith.constant 0 : i32
    %c0_i32_0 = arith.constant 0 : i32
    return %arg0, %c0_i32 : i32, i32
  }
  func.func @transform_1(%arg0: i32, %arg1: i32) -> (i32, i32) {
    %c0_i32 = arith.constant 0 : i32
    %c0_i32_0 = arith.constant 0 : i32
    return %arg1, %c0_i32 : i32, i32
  }
  func.func @transform_2(%arg0: i32, %arg1: i32) -> (i32, i32) {
    %c0_i32 = arith.constant 0 : i32
    %c0_i32_0 = arith.constant 0 : i32
    return %arg1, %c0_i32 : i32, i32
  }
  func.func @transform_3(%arg0: i32, %arg1: i32) -> (i32, i32) {
    %c0_i32 = arith.constant 0 : i32
    return %arg0, %arg1 : i32, i32
  }
  func.func @transform_4(%arg0: i32, %arg1: i32) -> (i32, i32) {
    %c0_i32 = arith.constant 0 : i32
    %c0_i32_0 = arith.constant 0 : i32
    return %arg0, %c0_i32 : i32, i32
  }
}

module attributes {stable_mosaic.version = 11 : i64} {
  func.func @_beta_gate_kernel(%arg0: i32, %arg1: memref<16x16xf32, #tpu.memory_space<vmem>>, %arg2: memref<16x16xf32, #tpu.memory_space<vmem>>, %arg3: memref<3x16xf32, #tpu.memory_space<vmem>>, %arg4: memref<16x16xf32, #tpu.memory_space<vmem>>) attributes {dimension_semantics = [#tpu.dimension_semantics<parallel>], iteration_bounds = array<i64: 1>, scalar_prefetch = 0 : i64, scratch_operands = 0 : i64, tpu.core_type = #tpu.core_type<tc>, window_params = [{transform_indices = @transform_0, window_bounds = array<i64: 16, 16>}, {transform_indices = @transform_1, window_bounds = array<i64: 16, 16>}, {pipeline_mode = #tpu.pipeline_mode<synchronous>, transform_indices = @transform_2, window_bounds = array<i64: 3, 16>}, {transform_indices = @transform_3, window_bounds = array<i64: 16, 16>}]} {
    %c0 = arith.constant 0 : index
    %c0_0 = arith.constant 0 : index
    %0 = vector.load %arg1[%c0, %c0_0] : memref<16x16xf32, #tpu.memory_space<vmem>>, vector<16x16xf32>
    %c0_1 = arith.constant 0 : index
    %c0_2 = arith.constant 0 : index
    %1 = vector.load %arg2[%c0_1, %c0_2] : memref<16x16xf32, #tpu.memory_space<vmem>>, vector<16x16xf32>
    %c0_3 = arith.constant 0 : index
    %c0_4 = arith.constant 0 : index
    %2 = vector.load %arg3[%c0_3, %c0_4] : memref<3x16xf32, #tpu.memory_space<vmem>>, vector<3x16xf32>
    %3 = vector.extract_strided_slice %2 {offsets = [0, 0], sizes = [1, 16], strides = [1, 1]} : vector<3x16xf32> to vector<1x16xf32>
    %4 = vector.broadcast %3 : vector<1x16xf32> to vector<16x16xf32>
    %5 = arith.mulf %0, %4 : vector<16x16xf32>
    %6 = vector.extract_strided_slice %2 {offsets = [1, 0], sizes = [1, 16], strides = [1, 1]} : vector<3x16xf32> to vector<1x16xf32>
    %7 = vector.broadcast %6 : vector<1x16xf32> to vector<16x16xf32>
    %8 = arith.mulf %1, %7 : vector<16x16xf32>
    %9 = arith.addf %5, %8 : vector<16x16xf32>
    %10 = arith.subf %0, %1 : vector<16x16xf32>
    %11 = vector.extract_strided_slice %2 {offsets = [2, 0], sizes = [1, 16], strides = [1, 1]} : vector<3x16xf32> to vector<1x16xf32>
    %12 = vector.broadcast %11 : vector<1x16xf32> to vector<16x16xf32>
    %13 = arith.mulf %10, %12 : vector<16x16xf32>
    %14 = arith.addf %9, %13 : vector<16x16xf32>
    %cst = arith.constant dense<0.000000e+00> : vector<16xf32>
    %15 = vector.multi_reduction <add>, %14, %cst [1] : vector<16x16xf32> to vector<16xf32>
    %16 = vector.shape_cast %15 : vector<16xf32> to vector<16x1xf32>
    %cst_5 = arith.constant 0.000000e+00 : f32
    %17 = vector.broadcast %cst_5 : f32 to vector<16x1xf32>
    %18 = arith.subf %17, %16 : vector<16x1xf32>
    %19 = math.exp %18 : vector<16x1xf32>
    %cst_6 = arith.constant 1.000000e+00 : f32
    %20 = vector.broadcast %cst_6 : f32 to vector<16x1xf32>
    %21 = arith.addf %20, %19 : vector<16x1xf32>
    %cst_7 = arith.constant 1.000000e+00 : f32
    %22 = vector.broadcast %cst_7 : f32 to vector<16x1xf32>
    %23 = arith.divf %22, %21 : vector<16x1xf32>
    %24 = vector.broadcast %23 : vector<16x1xf32> to vector<16x16xf32>
    %25 = arith.mulf %24, %1 : vector<16x16xf32>
    %cst_8 = arith.constant 1.000000e+00 : f32
    %26 = vector.broadcast %cst_8 : f32 to vector<16x1xf32>
    %27 = arith.subf %26, %23 : vector<16x1xf32>
    %28 = vector.broadcast %27 : vector<16x1xf32> to vector<16x16xf32>
    %29 = arith.mulf %28, %0 : vector<16x16xf32>
    %30 = arith.addf %25, %29 : vector<16x16xf32>
    %c0_9 = arith.constant 0 : index
    %c0_10 = arith.constant 0 : index
    %31 = vector.load %arg4[%c0_9, %c0_10] : memref<16x16xf32, #tpu.memory_space<vmem>>, vector<16x16xf32>
    tpu.vector_store %arg4[%c0_9, %c0_10], %30 {strides = array<i32>} : memref<16x16xf32, #tpu.memory_space<vmem>>, vector<16x16xf32>,
    return
  }
  func.func @transform_0(%arg0: i32) -> (i32, i32) {
    %c0_i32 = arith.constant 0 : i32
    %c0_i32_0 = arith.constant 0 : i32
    return %arg0, %c0_i32 : i32, i32
  }
  func.func @transform_1(%arg0: i32) -> (i32, i32) {
    %c0_i32 = arith.constant 0 : i32
    %c0_i32_0 = arith.constant 0 : i32
    return %arg0, %c0_i32 : i32, i32
  }
  func.func @transform_2(%arg0: i32) -> (i32, i32) {
    %c0_i32 = arith.constant 0 : i32
    %c0_i32_0 = arith.constant 0 : i32
    %c0_i32_1 = arith.constant 0 : i32
    return %c0_i32, %c0_i32_0 : i32, i32
  }
  func.func @transform_3(%arg0: i32) -> (i32, i32) {
    %c0_i32 = arith.constant 0 : i32
    %c0_i32_0 = arith.constant 0 : i32
    return %arg0, %c0_i32 : i32, i32
  }
}

module attributes {stable_mosaic.version = 11 : i64} {
  func.func @_beta_gate_kernel(%arg0: i32, %arg1: memref<16x16xf32, #tpu.memory_space<vmem>>, %arg2: memref<16x16xf32, #tpu.memory_space<vmem>>, %arg3: memref<3x16xf32, #tpu.memory_space<vmem>>, %arg4: memref<16x16xf32, #tpu.memory_space<vmem>>) attributes {dimension_semantics = [#tpu.dimension_semantics<parallel>], iteration_bounds = array<i64: 1>, scalar_prefetch = 0 : i64, scratch_operands = 0 : i64, tpu.core_type = #tpu.core_type<tc>, window_params = [{transform_indices = @transform_0, window_bounds = array<i64: 16, 16>}, {transform_indices = @transform_1, window_bounds = array<i64: 16, 16>}, {pipeline_mode = #tpu.pipeline_mode<synchronous>, transform_indices = @transform_2, window_bounds = array<i64: 3, 16>}, {transform_indices = @transform_3, window_bounds = array<i64: 16, 16>}]} {
    %c0 = arith.constant 0 : index
    %c0_0 = arith.constant 0 : index
    %0 = vector.load %arg1[%c0, %c0_0] : memref<16x16xf32, #tpu.memory_space<vmem>>, vector<16x16xf32>
    %c0_1 = arith.constant 0 : index
    %c0_2 = arith.constant 0 : index
    %1 = vector.load %arg2[%c0_1, %c0_2] : memref<16x16xf32, #tpu.memory_space<vmem>>, vector<16x16xf32>
    %c0_3 = arith.constant 0 : index
    %c0_4 = arith.constant 0 : index
    %2 = vector.load %arg3[%c0_3, %c0_4] : memref<3x16xf32, #tpu.memory_space<vmem>>, vector<3x16xf32>
    %3 = vector.extract_strided_slice %2 {offsets = [0, 0], sizes = [1, 16], strides = [1, 1]} : vector<3x16xf32> to vector<1x16xf32>
    %4 = vector.broadcast %3 : vector<1x16xf32> to vector<16x16xf32>
    %5 = arith.mulf %0, %4 : vector<16x16xf32>
    %6 = vector.extract_strided_slice %2 {offsets = [1, 0], sizes = [1, 16], strides = [1, 1]} : vector<3x16xf32> to vector<1x16xf32>
    %7 = vector.broadcast %6 : vector<1x16xf32> to vector<16x16xf32>
    %8 = arith.mulf %1, %7 : vector<16x16xf32>
    %9 = arith.addf %5, %8 : vector<16x16xf32>
    %10 = arith.subf %0, %1 : vector<16x16xf32>
    %11 = vector.extract_strided_slice %2 {offsets = [2, 0], sizes = [1, 16], strides = [1, 1]} : vector<3x16xf32> to vector<1x16xf32>
    %12 = vector.broadcast %11 : vector<1x16xf32> to vector<16x16xf32>
    %13 = arith.mulf %10, %12 : vector<16x16xf32>
    %14 = arith.addf %9, %13 : vector<16x16xf32>
    %cst = arith.constant dense<0.000000e+00> : vector<16xf32>
    %15 = vector.multi_reduction <add>, %14, %cst [1] : vector<16x16xf32> to vector<16xf32>
    %16 = vector.shape_cast %15 : vector<16xf32> to vector<16x1xf32>
    %cst_5 = arith.constant 0.000000e+00 : f32
    %17 = vector.broadcast %cst_5 : f32 to vector<16x1xf32>
    %18 = arith.subf %17, %16 : vector<16x1xf32>
    %19 = math.exp %18 : vector<16x1xf32>
    %cst_6 = arith.constant 1.000000e+00 : f32
    %20 = vector.broadcast %cst_6 : f32 to vector<16x1xf32>
    %21 = arith.addf %20, %19 : vector<16x1xf32>
    %cst_7 = arith.constant 1.000000e+00 : f32
    %22 = vector.broadcast %cst_7 : f32 to vector<16x1xf32>
    %23 = arith.divf %22, %21 : vector<16x1xf32>
    %24 = vector.broadcast %23 : vector<16x1xf32> to vector<16x16xf32>
    %25 = arith.mulf %24, %1 : vector<16x16xf32>
    %cst_8 = arith.constant 1.000000e+00 : f32
    %26 = vector.broadcast %cst_8 : f32 to vector<16x1xf32>
    %27 = arith.subf %26, %23 : vector<16x1xf32>
    %28 = vector.broadcast %27 : vector<16x1xf32> to vector<16x16xf32>
    %29 = arith.mulf %28, %0 : vector<16x16xf32>
    %30 = arith.addf %25, %29 : vector<16x16xf32>
    %cst_9 = arith.constant 0.000000e+00 : f32
    %31 = vector.broadcast %cst_9 : f32 to vector<16x16xf32>
    %32 = arith.cmpf ogt, %30, %31 : vector<16x16xf32>
    %cst_10 = arith.constant 0.000000e+00 : f32
    %33 = vector.broadcast %cst_10 : f32 to vector<16x16xf32>
    %34 = arith.minimumf %30, %33 : vector<16x16xf32>
    %35 = math.exp %34 : vector<16x16xf32>
    %cst_11 = arith.constant 1.000000e+00 : f32
    %36 = vector.broadcast %cst_11 : f32 to vector<16x16xf32>
    %37 = arith.subf %35, %36 : vector<16x16xf32>
    %38 = arith.select %32, %30, %37 : vector<16x16xi1>, vector<16x16xf32>
    %c0_12 = arith.constant 0 : index
    %c0_13 = arith.constant 0 : index
    %39 = vector.load %arg4[%c0_12, %c0_13] : memref<16x16xf32, #tpu.memory_space<vmem>>, vector<16x16xf32>
    tpu.vector_store %arg4[%c0_12, %c0_13], %38 {strides = array<i32>} : memref<16x16xf32, #tpu.memory_space<vmem>>, vector<16x16xf32>,
    return
  }
  func.func @transform_0(%arg0: i32) -> (i32, i32) {
    %c0_i32 = arith.constant 0 : i32
    %c0_i32_0 = arith.constant 0 : i32
    return %arg0, %c0_i32 : i32, i32
  }
  func.func @transform_1(%arg0: i32) -> (i32, i32) {
    %c0_i32 = arith.constant 0 : i32
    %c0_i32_0 = arith.constant 0 : i32
    return %arg0, %c0_i32 : i32, i32
  }
  func.func @transform_2(%arg0: i32) -> (i32, i32) {
    %c0_i32 = arith.constant 0 : i32
    %c0_i32_0 = arith.constant 0 : i32
    %c0_i32_1 = arith.constant 0 : i32
    return %c0_i32, %c0_i32_0 : i32, i32
  }
  func.func @transform_3(%arg0: i32) -> (i32, i32) {
    %c0_i32 = arith.constant 0 : i32
    %c0_i32_0 = arith.constant 0 : i32
    return %arg0, %c0_i32 : i32, i32
  }
}

module attributes {stable_mosaic.version = 11 : i64} {
  func.func @_linear_kernel(%arg0: i32, %arg1: memref<16x16xf32, #tpu.memory_space<vmem>>, %arg2: memref<16x64xf32, #tpu.memory_space<vmem>>, %arg3: memref<1x64xf32, #tpu.memory_space<vmem>>, %arg4: memref<16x64xf32, #tpu.memory_space<vmem>>) attributes {dimension_semantics = [#tpu.dimension_semantics<parallel>], iteration_bounds = array<i64: 1>, scalar_prefetch = 0 : i64, scratch_operands = 0 : i64, tpu.core_type = #tpu.core_type<tc>, window_params = [{transform_indices = @transform_0, window_bounds = array<i64: 16, 16>}, {pipeline_mode = #tpu.pipeline_mode<synchronous>, transform_indices = @transform_1, window_bounds = array<i64: 16, 64>}, {pipeline_mode = #tpu.pipeline_mode<synchronous>, transform_indices = @transform_2, window_bounds = array<i64: 1, 64>}, {transform_indices = @transform_3, window_bounds = array<i64: 16, 64>}]} {
    %c0 = arith.constant 0 : index
    %c0_0 = arith.constant 0 : index
    %0 = vector.load %arg1[%c0, %c0_0] : memref<16x16xf32, #tpu.memory_space<vmem>>, vector<16x16xf32>
    %c0_1 = arith.constant 0 : index
    %c0_2 = arith.constant 0 : index
    %1 = vector.load %arg2[%c0_1, %c0_2] : memref<16x64xf32, #tpu.memory_space<vmem>>, vector<16x64xf32>
    %cst = arith.constant dense<0.000000e+00> : vector<16x64xf32>
    %2 = tpu.matmul %0, %1, %cst {dimension_numbers = #tpu.dot_dimension_numbers<[1], [0], [0], [1], [0, 0, 1, 1], [], []>} : vector<16x16xf32>, vector<16x64xf32>, vector<16x64xf32> -> vector<16x64xf32>
    %c0_3 = arith.constant 0 : index
    %c0_4 = arith.constant 0 : index
    %3 = vector.load %arg3[%c0_3, %c0_4] : memref<1x64xf32, #tpu.memory_space<vmem>>, vector<1x64xf32>
    %4 = vector.broadcast %3 : vector<1x64xf32> to vector<16x64xf32>
    %5 = arith.addf %2, %4 : vector<16x64xf32>
    %c0_5 = arith.constant 0 : index
    %c0_6 = arith.constant 0 : index
    %6 = vector.load %arg4[%c0_5, %c0_6] : memref<16x64xf32, #tpu.memory_space<vmem>>, vector<16x64xf32>
    tpu.vector_store %arg4[%c0_5, %c0_6], %5 {strides = array<i32>} : memref<16x64xf32, #tpu.memory_space<vmem>>, vector<16x64xf32>,
    return
  }
  func.func @transform_0(%arg0: i32) -> (i32, i32) {
    %c0_i32 = arith.constant 0 : i32
    %c0_i32_0 = arith.constant 0 : i32
    return %arg0, %c0_i32 : i32, i32
  }
  func.func @transform_1(%arg0: i32) -> (i32, i32) {
    %c0_i32 = arith.constant 0 : i32
    %c0_i32_0 = arith.constant 0 : i32
    %c0_i32_1 = arith.constant 0 : i32
    return %c0_i32, %c0_i32_0 : i32, i32
  }
  func.func @transform_2(%arg0: i32) -> (i32, i32) {
    %c0_i32 = arith.constant 0 : i32
    %c0_i32_0 = arith.constant 0 : i32
    %c0_i32_1 = arith.constant 0 : i32
    return %c0_i32, %c0_i32_0 : i32, i32
  }
  func.func @transform_3(%arg0: i32) -> (i32, i32) {
    %c0_i32 = arith.constant 0 : i32
    %c0_i32_0 = arith.constant 0 : i32
    return %arg0, %c0_i32 : i32, i32
  }
}

module attributes {stable_mosaic.version = 11 : i64} {
  func.func @_beta_gate_kernel(%arg0: i32, %arg1: memref<16x32xf32, #tpu.memory_space<vmem>>, %arg2: memref<16x32xf32, #tpu.memory_space<vmem>>, %arg3: memref<3x32xf32, #tpu.memory_space<vmem>>, %arg4: memref<16x32xf32, #tpu.memory_space<vmem>>) attributes {dimension_semantics = [#tpu.dimension_semantics<parallel>], iteration_bounds = array<i64: 1>, scalar_prefetch = 0 : i64, scratch_operands = 0 : i64, tpu.core_type = #tpu.core_type<tc>, window_params = [{transform_indices = @transform_0, window_bounds = array<i64: 16, 32>}, {transform_indices = @transform_1, window_bounds = array<i64: 16, 32>}, {pipeline_mode = #tpu.pipeline_mode<synchronous>, transform_indices = @transform_2, window_bounds = array<i64: 3, 32>}, {transform_indices = @transform_3, window_bounds = array<i64: 16, 32>}]} {
    %c0 = arith.constant 0 : index
    %c0_0 = arith.constant 0 : index
    %0 = vector.load %arg1[%c0, %c0_0] : memref<16x32xf32, #tpu.memory_space<vmem>>, vector<16x32xf32>
    %c0_1 = arith.constant 0 : index
    %c0_2 = arith.constant 0 : index
    %1 = vector.load %arg2[%c0_1, %c0_2] : memref<16x32xf32, #tpu.memory_space<vmem>>, vector<16x32xf32>
    %c0_3 = arith.constant 0 : index
    %c0_4 = arith.constant 0 : index
    %2 = vector.load %arg3[%c0_3, %c0_4] : memref<3x32xf32, #tpu.memory_space<vmem>>, vector<3x32xf32>
    %3 = vector.extract_strided_slice %2 {offsets = [0, 0], sizes = [1, 32], strides = [1, 1]} : vector<3x32xf32> to vector<1x32xf32>
    %4 = vector.broadcast %3 : vector<1x32xf32> to vector<16x32xf32>
    %5 = arith.mulf %0, %4 : vector<16x32xf32>
    %6 = vector.extract_strided_slice %2 {offsets = [1, 0], sizes = [1, 32], strides = [1, 1]} : vector<3x32xf32> to vector<1x32xf32>
    %7 = vector.broadcast %6 : vector<1x32xf32> to vector<16x32xf32>
    %8 = arith.mulf %1, %7 : vector<16x32xf32>
    %9 = arith.addf %5, %8 : vector<16x32xf32>
    %10 = arith.subf %0, %1 : vector<16x32xf32>
    %11 = vector.extract_strided_slice %2 {offsets = [2, 0], sizes = [1, 32], strides = [1, 1]} : vector<3x32xf32> to vector<1x32xf32>
    %12 = vector.broadcast %11 : vector<1x32xf32> to vector<16x32xf32>
    %13 = arith.mulf %10, %12 : vector<16x32xf32>
    %14 = arith.addf %9, %13 : vector<16x32xf32>
    %cst = arith.constant dense<0.000000e+00> : vector<16xf32>
    %15 = vector.multi_reduction <add>, %14, %cst [1] : vector<16x32xf32> to vector<16xf32>
    %16 = vector.shape_cast %15 : vector<16xf32> to vector<16x1xf32>
    %cst_5 = arith.constant 0.000000e+00 : f32
    %17 = vector.broadcast %cst_5 : f32 to vector<16x1xf32>
    %18 = arith.subf %17, %16 : vector<16x1xf32>
    %19 = math.exp %18 : vector<16x1xf32>
    %cst_6 = arith.constant 1.000000e+00 : f32
    %20 = vector.broadcast %cst_6 : f32 to vector<16x1xf32>
    %21 = arith.addf %20, %19 : vector<16x1xf32>
    %cst_7 = arith.constant 1.000000e+00 : f32
    %22 = vector.broadcast %cst_7 : f32 to vector<16x1xf32>
    %23 = arith.divf %22, %21 : vector<16x1xf32>
    %24 = vector.broadcast %23 : vector<16x1xf32> to vector<16x32xf32>
    %25 = arith.mulf %24, %1 : vector<16x32xf32>
    %cst_8 = arith.constant 1.000000e+00 : f32
    %26 = vector.broadcast %cst_8 : f32 to vector<16x1xf32>
    %27 = arith.subf %26, %23 : vector<16x1xf32>
    %28 = vector.broadcast %27 : vector<16x1xf32> to vector<16x32xf32>
    %29 = arith.mulf %28, %0 : vector<16x32xf32>
    %30 = arith.addf %25, %29 : vector<16x32xf32>
    %c0_9 = arith.constant 0 : index
    %c0_10 = arith.constant 0 : index
    %31 = vector.load %arg4[%c0_9, %c0_10] : memref<16x32xf32, #tpu.memory_space<vmem>>, vector<16x32xf32>
    tpu.vector_store %arg4[%c0_9, %c0_10], %30 {strides = array<i32>} : memref<16x32xf32, #tpu.memory_space<vmem>>, vector<16x32xf32>,
    return
  }
  func.func @transform_0(%arg0: i32) -> (i32, i32) {
    %c0_i32 = arith.constant 0 : i32
    %c0_i32_0 = arith.constant 0 : i32
    return %arg0, %c0_i32 : i32, i32
  }
  func.func @transform_1(%arg0: i32) -> (i32, i32) {
    %c0_i32 = arith.constant 0 : i32
    %c0_i32_0 = arith.constant 0 : i32
    return %arg0, %c0_i32 : i32, i32
  }
  func.func @transform_2(%arg0: i32) -> (i32, i32) {
    %c0_i32 = arith.constant 0 : i32
    %c0_i32_0 = arith.constant 0 : i32
    %c0_i32_1 = arith.constant 0 : i32
    return %c0_i32, %c0_i32_0 : i32, i32
  }
  func.func @transform_3(%arg0: i32) -> (i32, i32) {
    %c0_i32 = arith.constant 0 : i32
    %c0_i32_0 = arith.constant 0 : i32
    return %arg0, %c0_i32 : i32, i32
  }
}

</mosaic_0001>

<llo_original>
// kernel: trans_img2_forward.36
$region0: #{trans_img2_forward.36}
  #allocation0 [shape = 'u32[]', space=smem, size = 0x4, offset = 0x4, fixed_abs, tag = 'smem constant byte address 0x4 - core index']
  #allocation1 [shape = 'u32[144,128]{1,0:T(1,128)}', space=vmem, size = 0x12000, scoped, tag = 'internal scratch']
  %s0 = inlined_call_operand.vmem [shape: f32[16,32], index: 0, kind: input, shape index: {}]
  %s1 = inlined_call_operand.vmem [shape: f32[32,128], index: 1, kind: input, shape index: {}]
  %s2 = inlined_call_operand.vmem [shape: f32[1,128], index: 2, kind: input, shape index: {}]
  %s3 = inlined_call_operand.vmem [shape: f32[16,128], index: 3, kind: output, shape index: {}]
  %s4 = sld [smem:[#allocation0]]
  $region22: #{trans_img2_forward.36} parent=0
    _
  %s6 = ssub.s32 1, %s4
  %s7 = scalar_select 0, %s6, %s4
  // Predicated region
  $region2: #{trans_img2_forward.36} parent=0 // pred_check
    _
  $region3: #{trans_img2_forward.36} parent=0 // pred_check_branch
    %9 = sbr.rel (0) target = $region5
  $region4: #{trans_img2_forward.36} parent=0 // pred_region
    _
  $region5: #{trans_img2_forward.36} parent=0 // pred_fallthru
    _
  // Predicated region
  $region6: #{trans_img2_forward.36} parent=0 // pred_check
    _
  $region7: #{trans_img2_forward.36} parent=0 // pred_check_branch
    %11 = sbr.rel (0) target = $region9
  $region8: #{trans_img2_forward.36} parent=0 // pred_region
    _
  $region9: #{trans_img2_forward.36} parent=0 // pred_fallthru
    _
  // Predicated region
  $region10: #{trans_img2_forward.36} parent=0 // pred_check
    _
  $region11: #{trans_img2_forward.36} parent=0 // pred_check_branch
    %13 = sbr.rel (0) target = $region13
  $region12: #{trans_img2_forward.36} parent=0 // pred_region
    _
  $region13: #{trans_img2_forward.36} parent=0 // pred_fallthru
    _
  %v14 = vld [vmem:[%s0] sm:$0xff]
  %v15 = vld [vmem:[%s0 + $0x8] sm:$0xff]
  %v16 = vld [vmem:[%s1] sm:$0xff]
  %v17 = vld [vmem:[%s1 + $0x8] sm:$0xff]
  %v18 = vld [vmem:[%s1 + $0x10] sm:$0xff]
  %v19 = vld [vmem:[%s1 + $0x18] sm:$0xff]
  %v20 = vld [vmem:[%s2] sm:$0x1]
  %v22 = vlaneseq
  %v23 = vshrl.u32 %v22, 7
  %v24 = vsub.s32 0, %v23
  %v25 = vrot.slane %v20, %v24
  %vm27 = vcmask 261120
  %v29 = vsel %vm27, %v14, 0
  %v32 = vsel %vm27, %v15, 0
  %34 = vmatprep.subr.mxu0 0.0
  %35 = vmatpush1.msra.mxu0 %v16
  %36 = vmatprep.subr.mxu0 0.0
  %37 = vmatpush1.msra.mxu0 %v17
  %38 = vmatprep.subr.mxu0 0.0
  %39 = vmatpush1.msra.mxu0 %v18
  %40 = vmatprep.subr.mxu0 0.0
  %41 = vmatpush1.msra.mxu0 %v19
  %42 = vmatprep.subr.mxu0 0.0
  %43 = vmatpush1.msra.mxu0 0.0
  %44 = vmatprep.subr.mxu0 0.0
  %45 = vmatpush1.msra.mxu0 0.0
  %46 = vmatprep.subr.mxu0 0.0
  %47 = vmatpush1.msra.mxu0 0.0
  %48 = vmatprep.subr.mxu0 0.0
  %49 = vmatpush1.msra.mxu0 0.0
  %50 = vmatprep.subr.mxu0 0.0
  %51 = vmatpush1.msra.mxu0 0.0
  %52 = vmatprep.subr.mxu0 0.0
  %53 = vmatpush1.msra.mxu0 0.0
  %54 = vmatprep.subr.mxu0 0.0
  %55 = vmatpush1.msra.mxu0 0.0
  %56 = vmatprep.subr.mxu0 0.0
  %57 = vmatpush1.msra.mxu0 0.0
  %58 = vmatprep.subr.mxu0 0.0
  %59 = vmatpush1.msra.mxu0 0.0
  %60 = vmatprep.subr.mxu0 0.0
  %61 = vmatpush1.msra.mxu0 0.0
  %62 = vmatprep.subr.mxu0 0.0
  %63 = vmatpush1.msra.mxu0 0.0
  %64 = vmatprep.subr.mxu0 0.0
  %65 = vmatpush1.msra.mxu0 0.0
  %66 = vmatprep.subr.mxu0 0.0
  %67 = vmatpush1.msra.mxu0 0.0
  %68 = vmatprep.subr.mxu0 0.0
  %69 = vmatpush1.msra.mxu0 0.0
  %70 = vmatprep.subr.mxu0 0.0
  %71 = vmatpush1.msra.mxu0 0.0
  %72 = vmatprep.subr.mxu0 0.0
  %73 = vmatpush1.msra.mxu0 0.0
  %74 = vmatprep.subr.mxu0 0.0
  %75 = vmatpush1.msra.mxu0 0.0
  %76 = vmatprep.subr.mxu0 0.0
  %77 = vmatpush1.msra.mxu0 0.0
  %78 = vmatprep.subr.mxu0 0.0
  %79 = vmatpush1.msra.mxu0 0.0
  %80 = vmatprep.subr.mxu0 0.0
  %81 = vmatpush1.msra.mxu0 0.0
  %82 = vmatprep.subr.mxu0 0.0
  %83 = vmatpush1.msra.mxu0 0.0
  %84 = vmatprep.subr.mxu0 0.0
  %85 = vmatpush1.msra.mxu0 0.0
  %86 = vmatprep.subr.mxu0 0.0
  %87 = vmatpush1.msra.mxu0 0.0
  %88 = vmatprep.subr.mxu0 0.0
  %89 = vmatpush1.msra.mxu0 0.0
  %90 = vmatprep.subr.mxu0 0.0
  %91 = vmatpush1.msra.mxu0 0.0
  %92 = vmatprep.subr.mxu0 0.0
  %93 = vmatpush1.msra.mxu0 0.0
  %94 = vmatprep.subr.mxu0 0.0
  %95 = vmatpush1.msra.mxu0 0.0
  %96 = vmatprep.subr.mxu0 0.0
  %97 = vmatpush1.msra.mxu0 0.0
  %98 = vmatprep.mubr.f32.mxu0 0.0
  %99 = vmatmul.mubr.f32.gmra.mrb[0].mxu0 %v29
  %v100 = vpop.f32.mrb[0].mxu0
  %v101 = vadd.f32 %v25, %v100
  %v102 = vpop.f32.mrb[0].mxu0
  %103 = vmatprep.mubr.f32.mxu0 0.0
  %104 = vmatmul.mubr.f32.gmra.mrb[0].mxu0 %v32
  %v105 = vpop.f32.mrb[0].mxu0
  %v106 = vadd.f32 %v25, %v105
  %v107 = vpop.f32.mrb[0].mxu0
  %108 = vdwg.mxu0
  %109 = vst [vmem:[%s3] sm:$0xff] %v101
  %110 = vst [vmem:[%s3 + $0x8] sm:$0xff] %v106
  // Predicated region
  $region14: #{trans_img2_forward.36} parent=0 // pred_check
    _
  $region15: #{trans_img2_forward.36} parent=0 // pred_check_branch
    %112 = sbr.rel (0) target = $region17
  $region16: #{trans_img2_forward.36} parent=0 // pred_region
    _
  $region17: #{trans_img2_forward.36} parent=0 // pred_fallthru
    _
  // Predicated region
  $region18: #{trans_img2_forward.36} parent=0 // pred_check
    _
  $region19: #{trans_img2_forward.36} parent=0 // pred_check_branch
    %114 = sbr.rel (0) target = $region21
  $region20: #{trans_img2_forward.36} parent=0 // pred_region
    _
  $region21: #{trans_img2_forward.36} parent=0 // pred_fallthru
    _

// kernel: trans_img2_forward.49
$region0: #{trans_img2_forward.49}
  #allocation0 [shape = 'u32[]', space=smem, size = 0x4, offset = 0x4, fixed_abs, tag = 'smem constant byte address 0x4 - core index']
  #allocation1 [shape = 'u32[144,128]{1,0:T(1,128)}', space=vmem, size = 0x12000, scoped, tag = 'internal scratch']
  #allocation2 [shape = 'f32[16,1]{1,0:T(8,128)}', space=vmem, size = 0x2000, scoped, tag = 'scratch operand']
  #allocation3 [shape = 'f32[16,1]{1,0:T(8,128)}', space=vmem, size = 0x2000, scoped, tag = 'scratch operand']
  #allocation4 [shape = 'f32[16,32]{1,0:T(8,128)}', space=vmem, size = 0x2000, scoped, tag = 'scratch operand']
  %s0 = inlined_call_operand.vmem [shape: f32[16,32], index: 0, kind: input, shape index: {}]
  %s1 = inlined_call_operand.vmem [shape: f32[16,32], index: 1, kind: input, shape index: {}]
  %s2 = inlined_call_operand.vmem [shape: f32[16,32], index: 2, kind: input, shape index: {}]
  %s3 = inlined_call_operand.vmem [shape: f32[16,16], index: 3, kind: input, shape index: {}]
  %s4 = inlined_call_operand.vmem [shape: f32[16,32], index: 4, kind: output, shape index: {}]
  %s5 = sld [smem:[#allocation0]]
  $region34: #{trans_img2_forward.49} parent=0
    _
  %s7 = ssub.s32 1, %s5
  %s8 = scalar_select 0, %s7, %s5
  // Predicated region
  $region2: #{trans_img2_forward.49} parent=0 // pred_check
    _
  $region3: #{trans_img2_forward.49} parent=0 // pred_check_branch
    %10 = sbr.rel (0) target = $region5
  $region4: #{trans_img2_forward.49} parent=0 // pred_region
    _
  $region5: #{trans_img2_forward.49} parent=0 // pred_fallthru
    _
  // Predicated region
  $region6: #{trans_img2_forward.49} parent=0 // pred_check
    _
  $region7: #{trans_img2_forward.49} parent=0 // pred_check_branch
    %12 = sbr.rel (0) target = $region9
  $region8: #{trans_img2_forward.49} parent=0 // pred_region
    _
  $region9: #{trans_img2_forward.49} parent=0 // pred_fallthru
    _
  // Predicated region
  $region10: #{trans_img2_forward.49} parent=0 // pred_check
    _
  $region11: #{trans_img2_forward.49} parent=0 // pred_check_branch
    %14 = sbr.rel (0) target = $region13
  $region12: #{trans_img2_forward.49} parent=0 // pred_region
    _
  $region13: #{trans_img2_forward.49} parent=0 // pred_fallthru
    _
  // Predicated region
  $region14: #{trans_img2_forward.49} parent=0 // pred_check
    _
  $region15: #{trans_img2_forward.49} parent=0 // pred_check_branch
    %16 = sbr.rel (0) target = $region17
  $region16: #{trans_img2_forward.49} parent=0 // pred_region
    _
  $region17: #{trans_img2_forward.49} parent=0 // pred_fallthru
    _
  %p17 = scmp.eq.s32.totalorder 0, 0
  // Predicated region
  $region18: #{trans_img2_forward.49} parent=0 // pred_check
    %p18 = pneg %p17
  $region19: #{trans_img2_forward.49} parent=0 // pred_check_branch
    %20 = sbr.rel (%p18) target = $region21
  $region20: #{trans_img2_forward.49} parent=0 // pred_region
    %vm21 = vcmask 7168
    %22 = vst.msk [vmem:[#allocation2] sm:$0xff] %vm21, -1e+30
    %23 = vst.msk [vmem:[#allocation2 + $0x8] sm:$0xff] %vm21, -1e+30
    %24 = vst.msk [vmem:[#allocation3] sm:$0xff] %vm21, 0.0
    %25 = vst.msk [vmem:[#allocation3 + $0x8] sm:$0xff] %vm21, 0.0
    %vm26 = vcmask 261120
    %27 = vst.msk [vmem:[#allocation4] sm:$0xff] %vm26, 0.0
    %28 = vst.msk [vmem:[#allocation4 + $0x8] sm:$0xff] %vm26, 0.0
  $region21: #{trans_img2_forward.49} parent=0 // pred_fallthru
    _
  %v29 = vld [vmem:[%s0] sm:$0xff]
  %v30 = vld [vmem:[%s0 + $0x8] sm:$0xff]
  %v31 = vmul.f32 %v29, 0.17677669
  %v32 = vmul.f32 %v30, 0.17677669
  %v33 = vld [vmem:[%s1] sm:$0xff]
  %v34 = vld [vmem:[%s1 + $0x8] sm:$0xff]
  %vm35 = vcmask 261120
  %v37 = vsel %vm35, %v31, 0
  %v40 = vsel %vm35, %v32, 0
  %v43 = vsel %vm35, %v33, 0
  %v46 = vsel %vm35, %v34, 0
  %48 = vmatprep.subr.mxu0 0.0
  %49 = vmatpush1.xpose.msra.mxu0 %v43
  %50 = vmatprep.subr.mxu0 0.0
  %51 = vmatpush1.xpose.msra.mxu0 %v46
  %52 = vmatprep.subr.mxu0 0.0
  %53 = vmatpush1.xpose.msra.mxu0 0.0
  %54 = vmatprep.subr.mxu0 0.0
  %55 = vmatpush1.xpose.msra.mxu0 0.0
  %56 = vmatprep.subr.mxu0 0.0
  %57 = vmatpush1.xpose.msra.mxu0 0.0
  %58 = vmatprep.subr.mxu0 0.0
  %59 = vmatpush1.xpose.msra.mxu0 0.0
  %60 = vmatprep.subr.mxu0 0.0
  %61 = vmatpush1.xpose.msra.mxu0 0.0
  %62 = vmatprep.subr.mxu0 0.0
  %63 = vmatpush1.xpose.msra.mxu0 0.0
  %64 = vmatprep.subr.mxu0 0.0
  %65 = vmatpush1.xpose.msra.mxu0 0.0
  %66 = vmatprep.subr.mxu0 0.0
  %67 = vmatpush1.xpose.msra.mxu0 0.0
  %68 = vmatprep.subr.mxu0 0.0
  %69 = vmatpush1.xpose.msra.mxu0 0.0
  %70 = vmatprep.subr.mxu0 0.0
  %71 = vmatpush1.xpose.msra.mxu0 0.0
  %72 = vmatprep.subr.mxu0 0.0
  %73 = vmatpush1.xpose.msra.mxu0 0.0
  %74 = vmatprep.subr.mxu0 0.0
  %75 = vmatpush1.xpose.msra.mxu0 0.0
  %76 = vmatprep.subr.mxu0 0.0
  %77 = vmatpush1.xpose.msra.mxu0 0.0
  %78 = vmatprep.subr.mxu0 0.0
  %79 = vmatpush1.xpose.msra.mxu0 0.0
  %80 = vmatprep.subr.mxu0 0.0
  %81 = vmatpush1.xpose.msra.mxu0 0.0
  %82 = vmatprep.subr.mxu0 0.0
  %83 = vmatpush1.xpose.msra.mxu0 0.0
  %84 = vmatprep.subr.mxu0 0.0
  %85 = vmatpush1.xpose.msra.mxu0 0.0
  %86 = vmatprep.subr.mxu0 0.0
  %87 = vmatpush1.xpose.msra.mxu0 0.0
  %88 = vmatprep.subr.mxu0 0.0
  %89 = vmatpush1.xpose.msra.mxu0 0.0
  %90 = vmatprep.subr.mxu0 0.0
  %91 = vmatpush1.xpose.msra.mxu0 0.0
  %92 = vmatprep.subr.mxu0 0.0
  %93 = vmatpush1.xpose.msra.mxu0 0.0
  %94 = vmatprep.subr.mxu0 0.0
  %95 = vmatpush1.xpose.msra.mxu0 0.0
  %96 = vmatprep.subr.mxu0 0.0
  %97 = vmatpush1.xpose.msra.mxu0 0.0
  %98 = vmatprep.subr.mxu0 0.0
  %99 = vmatpush1.xpose.msra.mxu0 0.0
  %100 = vmatprep.subr.mxu0 0.0
  %101 = vmatpush1.xpose.msra.mxu0 0.0
  %102 = vmatprep.subr.mxu0 0.0
  %103 = vmatpush1.xpose.msra.mxu0 0.0
  %104 = vmatprep.subr.mxu0 0.0
  %105 = vmatpush1.xpose.msra.mxu0 0.0
  %106 = vmatprep.subr.mxu0 0.0
  %107 = vmatpush1.xpose.msra.mxu0 0.0
  %108 = vmatprep.subr.mxu0 0.0
  %109 = vmatpush1.xpose.msra.mxu0 0.0
  %110 = vmatprep.subr.mxu0 0.0
  %111 = vmatpush1.xpose.msra.mxu0 0.0
  %112 = vmatprep.mubr.f32.mxu0 0.0
  %113 = vmatmul.mubr.f32.gmra.mrb[0].mxu0 %v37
  %v114 = vpop.f32.mrb[0].mxu0
  %v115 = vadd.f32 0.0, %v114
  %v116 = vpop.f32.mrb[0].mxu0
  %117 = vmatprep.mubr.f32.mxu0 0.0
  %118 = vmatmul.mubr.f32.gmra.mrb[0].mxu0 %v40
  %v119 = vpop.f32.mrb[0].mxu0
  %v120 = vadd.f32 0.0, %v119
  %v121 = vpop.f32.mrb[0].mxu0
  %122 = vdwg.mxu0
  %v123 = vld [vmem:[%s3] sm:$0xff]
  %v124 = vld [vmem:[%s3 + $0x8] sm:$0xff]
  %vm125 = vcmp.gt.f32.partialorder %v123, 0.0
  %vm126 = vcmp.gt.f32.partialorder %v124, 0.0
  %v127 = vsel %vm125, %v115, -1e+30
  %v128 = vsel %vm126, %v120, -1e+30
  %v129 = vld [vmem:[#allocation2] sm:$0xff]
  %v130 = vld [vmem:[#allocation2 + $0x8] sm:$0xff]
  %vm131 = vcmask 130048
  %v132 = vsel %vm131, %v127, -inf
  %133 = vmax.xlane.f32.xlu0 %v132
  %v134 = vpop.xlane.xlu0 %133
  %v135 = vsel %vm131, %v128, -inf
  %136 = vmax.xlane.f32.xlu0 %v135
  %v137 = vpop.xlane.xlu0 %136
  %v138 = vmax.f32 %v129, %v134
  %v139 = vmax.f32 %v130, %v137
  %v140 = vsub.f32 %v129, %v138
  %v141 = vsub.f32 %v130, %v139
  %v142 = vmul.f32 %v140, 1.442695
  %v143 = vpow.pop %v142
  %v144 = vmul.f32 %v141, 1.442695
  %v145 = vpow.pop %v144
  %147 = vset.pattern.permute.xlu0 0
  %148 = vperm.xlu0 %147, %v138
  %v149 = vpop.permute.xlu0 %148
  %152 = vset.pattern.permute.xlu0 0
  %153 = vperm.xlu0 %152, %v139
  %v154 = vpop.permute.xlu0 %153
  %v156 = vsub.f32 %v127, %v149
  %v157 = vsub.f32 %v128, %v154
  %v158 = vmul.f32 %v156, 1.442695
  %v159 = vpow.pop %v158
  %v160 = vmul.f32 %v157, 1.442695
  %v161 = vpow.pop %v160
  %v162 = vmul.f32 %v159, %v123
  %v163 = vmul.f32 %v161, %v124
  %v164 = vld [vmem:[#allocation3] sm:$0xff]
  %v165 = vld [vmem:[#allocation3 + $0x8] sm:$0xff]
  %v166 = vmul.f32 %v143, %v164
  %v167 = vmul.f32 %v145, %v165
  %v168 = vsel %vm131, %v162, 0.0
  %169 = vadd.xlane.f32.xlu0 %v168
  %v170 = vpop.xlane.xlu0 %169
  %v171 = vsel %vm131, %v163, 0.0
  %172 = vadd.xlane.f32.xlu0 %v171
  %v173 = vpop.xlane.xlu0 %172
  %v174 = vadd.f32 %v166, %v170
  %v175 = vadd.f32 %v167, %v173
  %vm176 = vcmask 7168
  %177 = vst.msk [vmem:[#allocation3] sm:$0xff] %vm176, %v174
  %178 = vst.msk [vmem:[#allocation3 + $0x8] sm:$0xff] %vm176, %v175
  %v179 = vld [vmem:[#allocation4] sm:$0xff]
  %v180 = vld [vmem:[#allocation4 + $0x8] sm:$0xff]
  %182 = vset.pattern.permute.xlu0 0
  %183 = vperm.xlu0 %182, %v143
  %v184 = vpop.permute.xlu0 %183
  %187 = vset.pattern.permute.xlu0 0
  %188 = vperm.xlu0 %187, %v145
  %v189 = vpop.permute.xlu0 %188
  %v191 = vmul.f32 %v184, %v179
  %v192 = vmul.f32 %v189, %v180
  %v193 = vld [vmem:[%s2] sm:$0xff]
  %v194 = vld [vmem:[%s2 + $0x8] sm:$0xff]
  %v196 = vsel %vm131, %v162, 0
  %v199 = vsel %vm131, %v163, 0
  %201 = vmatprep.subr.mxu0 0.0
  %202 = vmatpush1.msra.mxu0 %v193
  %203 = vmatprep.subr.mxu0 0.0
  %204 = vmatpush1.msra.mxu0 %v194
  %205 = vmatprep.subr.mxu0 0.0
  %206 = vmatpush1.msra.mxu0 0.0
  %207 = vmatprep.subr.mxu0 0.0
  %208 = vmatpush1.msra.mxu0 0.0
  %209 = vmatprep.subr.mxu0 0.0
  %210 = vmatpush1.msra.mxu0 0.0
  %211 = vmatprep.subr.mxu0 0.0
  %212 = vmatpush1.msra.mxu0 0.0
  %213 = vmatprep.subr.mxu0 0.0
  %214 = vmatpush1.msra.mxu0 0.0
  %215 = vmatprep.subr.mxu0 0.0
  %216 = vmatpush1.msra.mxu0 0.0
  %217 = vmatprep.subr.mxu0 0.0
  %218 = vmatpush1.msra.mxu0 0.0
  %219 = vmatprep.subr.mxu0 0.0
  %220 = vmatpush1.msra.mxu0 0.0
  %221 = vmatprep.subr.mxu0 0.0
  %222 = vmatpush1.msra.mxu0 0.0
  %223 = vmatprep.subr.mxu0 0.0
  %224 = vmatpush1.msra.mxu0 0.0
  %225 = vmatprep.subr.mxu0 0.0
  %226 = vmatpush1.msra.mxu0 0.0
  %227 = vmatprep.subr.mxu0 0.0
  %228 = vmatpush1.msra.mxu0 0.0
  %229 = vmatprep.subr.mxu0 0.0
  %230 = vmatpush1.msra.mxu0 0.0
  %231 = vmatprep.subr.mxu0 0.0
  %232 = vmatpush1.msra.mxu0 0.0
  %233 = vmatprep.subr.mxu0 0.0
  %234 = vmatpush1.msra.mxu0 0.0
  %235 = vmatprep.subr.mxu0 0.0
  %236 = vmatpush1.msra.mxu0 0.0
  %237 = vmatprep.subr.mxu0 0.0
  %238 = vmatpush1.msra.mxu0 0.0
  %239 = vmatprep.subr.mxu0 0.0
  %240 = vmatpush1.msra.mxu0 0.0
  %241 = vmatprep.subr.mxu0 0.0
  %242 = vmatpush1.msra.mxu0 0.0
  %243 = vmatprep.subr.mxu0 0.0
  %244 = vmatpush1.msra.mxu0 0.0
  %245 = vmatprep.subr.mxu0 0.0
  %246 = vmatpush1.msra.mxu0 0.0
  %247 = vmatprep.subr.mxu0 0.0
  %248 = vmatpush1.msra.mxu0 0.0
  %249 = vmatprep.subr.mxu0 0.0
  %250 = vmatpush1.msra.mxu0 0.0
  %251 = vmatprep.subr.mxu0 0.0
  %252 = vmatpush1.msra.mxu0 0.0
  %253 = vmatprep.subr.mxu0 0.0
  %254 = vmatpush1.msra.mxu0 0.0
  %255 = vmatprep.subr.mxu0 0.0
  %256 = vmatpush1.msra.mxu0 0.0
  %257 = vmatprep.subr.mxu0 0.0
  %258 = vmatpush1.msra.mxu0 0.0
  %259 = vmatprep.subr.mxu0 0.0
  %260 = vmatpush1.msra.mxu0 0.0
  %261 = vmatprep.subr.mxu0 0.0
  %262 = vmatpush1.msra.mxu0 0.0
  %263 = vmatprep.subr.mxu0 0.0
  %264 = vmatpush1.msra.mxu0 0.0
  %265 = vmatprep.mubr.f32.mxu0 0.0
  %266 = vmatmul.mubr.f32.gmra.mrb[0].mxu0 %v196
  %v267 = vpop.f32.mrb[0].mxu0
  %v268 = vadd.f32 0.0, %v267
  %v269 = vpop.f32.mrb[0].mxu0
  %270 = vmatprep.mubr.f32.mxu0 0.0
  %271 = vmatmul.mubr.f32.gmra.mrb[0].mxu0 %v199
  %v272 = vpop.f32.mrb[0].mxu0
  %v273 = vadd.f32 0.0, %v272
  %v274 = vpop.f32.mrb[0].mxu0
  %275 = vdwg.mxu0
  %v276 = vadd.f32 %v191, %v268
  %v277 = vadd.f32 %v192, %v273
  %278 = vst.msk [vmem:[#allocation4] sm:$0xff] %vm35, %v276
  %279 = vst.msk [vmem:[#allocation4 + $0x8] sm:$0xff] %vm35, %v277
  %280 = vst.msk [vmem:[#allocation2] sm:$0xff] %vm176, %v138
  %281 = vst.msk [vmem:[#allocation2 + $0x8] sm:$0xff] %vm176, %v139
  // Predicated region
  $region22: #{trans_img2_forward.49} parent=0 // pred_check
    %p282 = pneg %p17
  $region23: #{trans_img2_forward.49} parent=0 // pred_check_branch
    %284 = sbr.rel (%p282) target = $region25
  $region24: #{trans_img2_forward.49} parent=0 // pred_region
    %v285 = vld [vmem:[#allocation3] sm:$0xff]
    %v286 = vld [vmem:[#allocation3 + $0x8] sm:$0xff]
    %vm287 = vcmp.gt.f32.partialorder %v285, 0.0
    %vm288 = vcmp.gt.f32.partialorder %v286, 0.0
    %v289 = vsel %vm287, %v285, 1.0
    %v290 = vsel %vm288, %v286, 1.0
    %v291 = vld [vmem:[#allocation4] sm:$0xff]
    %v292 = vld [vmem:[#allocation4 + $0x8] sm:$0xff]
    %294 = vset.pattern.permute.xlu0 0
    %295 = vperm.xlu0 %294, %v289
    %v296 = vpop.permute.xlu0 %295
    %299 = vset.pattern.permute.xlu0 0
    %300 = vperm.xlu0 %299, %v290
    %v301 = vpop.permute.xlu0 %300
    %v303 = vrcp.pop %v296
    %v304 = vmul.f32 %v291, %v303
    %v305 = vrcp.pop %v301
    %v306 = vmul.f32 %v292, %v305
    %307 = vst.msk [vmem:[%s4] sm:$0xff] %vm35, %v304
    %308 = vst.msk [vmem:[%s4 + $0x8] sm:$0xff] %vm35, %v306
  $region25: #{trans_img2_forward.49} parent=0 // pred_fallthru
    _
  // Predicated region
  $region26: #{trans_img2_forward.49} parent=0 // pred_check
    _
  $region27: #{trans_img2_forward.49} parent=0 // pred_check_branch
    %310 = sbr.rel (0) target = $region29
  $region28: #{trans_img2_forward.49} parent=0 // pred_region
    _
  $region29: #{trans_img2_forward.49} parent=0 // pred_fallthru
    _
  // Predicated region
  $region30: #{trans_img2_forward.49} parent=0 // pred_check
    _
  $region31: #{trans_img2_forward.49} parent=0 // pred_check_branch
    %312 = sbr.rel (0) target = $region33
  $region32: #{trans_img2_forward.49} parent=0 // pred_region
    _
  $region33: #{trans_img2_forward.49} parent=0 // pred_fallthru
    _

// kernel: trans_img2_forward.48
$region0: #{trans_img2_forward.48}
  #allocation0 [shape = 'u32[]', space=smem, size = 0x4, offset = 0x4, fixed_abs, tag = 'smem constant byte address 0x4 - core index']
  #allocation1 [shape = 'u32[144,128]{1,0:T(1,128)}', space=vmem, size = 0x12000, scoped, tag = 'internal scratch']
  %s0 = inlined_call_operand.vmem [shape: f32[16,16], index: 0, kind: input, shape index: {}]
  %s1 = inlined_call_operand.vmem [shape: f32[16,128], index: 1, kind: input, shape index: {}]
  %s2 = inlined_call_operand.vmem [shape: f32[1,128], index: 2, kind: input, shape index: {}]
  %s3 = inlined_call_operand.vmem [shape: f32[16,128], index: 3, kind: output, shape index: {}]
  %s4 = sld [smem:[#allocation0]]
  $region22: #{trans_img2_forward.48} parent=0
    _
  %s6 = ssub.s32 1, %s4
  %s7 = scalar_select 0, %s6, %s4
  // Predicated region
  $region2: #{trans_img2_forward.48} parent=0 // pred_check
    _
  $region3: #{trans_img2_forward.48} parent=0 // pred_check_branch
    %9 = sbr.rel (0) target = $region5
  $region4: #{trans_img2_forward.48} parent=0 // pred_region
    _
  $region5: #{trans_img2_forward.48} parent=0 // pred_fallthru
    _
  // Predicated region
  $region6: #{trans_img2_forward.48} parent=0 // pred_check
    _
  $region7: #{trans_img2_forward.48} parent=0 // pred_check_branch
    %11 = sbr.rel (0) target = $region9
  $region8: #{trans_img2_forward.48} parent=0 // pred_region
    _
  $region9: #{trans_img2_forward.48} parent=0 // pred_fallthru
    _
  // Predicated region
  $region10: #{trans_img2_forward.48} parent=0 // pred_check
    _
  $region11: #{trans_img2_forward.48} parent=0 // pred_check_branch
    %13 = sbr.rel (0) target = $region13
  $region12: #{trans_img2_forward.48} parent=0 // pred_region
    _
  $region13: #{trans_img2_forward.48} parent=0 // pred_fallthru
    _
  %v14 = vld [vmem:[%s0] sm:$0xff]
  %v15 = vld [vmem:[%s0 + $0x8] sm:$0xff]
  %v16 = vld [vmem:[%s1] sm:$0xff]
  %v17 = vld [vmem:[%s1 + $0x8] sm:$0xff]
  %v18 = vld [vmem:[%s2] sm:$0x1]
  %v20 = vlaneseq
  %v21 = vshrl.u32 %v20, 7
  %v22 = vsub.s32 0, %v21
  %v23 = vrot.slane %v18, %v22
  %vm25 = vcmask 130048
  %v27 = vsel %vm25, %v14, 0
  %v30 = vsel %vm25, %v15, 0
  %32 = vmatprep.subr.mxu0 0.0
  %33 = vmatpush1.msra.mxu0 %v16
  %34 = vmatprep.subr.mxu0 0.0
  %35 = vmatpush1.msra.mxu0 %v17
  %36 = vmatprep.subr.mxu0 0.0
  %37 = vmatpush1.msra.mxu0 0.0
  %38 = vmatprep.subr.mxu0 0.0
  %39 = vmatpush1.msra.mxu0 0.0
  %40 = vmatprep.subr.mxu0 0.0
  %41 = vmatpush1.msra.mxu0 0.0
  %42 = vmatprep.subr.mxu0 0.0
  %43 = vmatpush1.msra.mxu0 0.0
  %44 = vmatprep.subr.mxu0 0.0
  %45 = vmatpush1.msra.mxu0 0.0
  %46 = vmatprep.subr.mxu0 0.0
  %47 = vmatpush1.msra.mxu0 0.0
  %48 = vmatprep.subr.mxu0 0.0
  %49 = vmatpush1.msra.mxu0 0.0
  %50 = vmatprep.subr.mxu0 0.0
  %51 = vmatpush1.msra.mxu0 0.0
  %52 = vmatprep.subr.mxu0 0.0
  %53 = vmatpush1.msra.mxu0 0.0
  %54 = vmatprep.subr.mxu0 0.0
  %55 = vmatpush1.msra.mxu0 0.0
  %56 = vmatprep.subr.mxu0 0.0
  %57 = vmatpush1.msra.mxu0 0.0
  %58 = vmatprep.subr.mxu0 0.0
  %59 = vmatpush1.msra.mxu0 0.0
  %60 = vmatprep.subr.mxu0 0.0
  %61 = vmatpush1.msra.mxu0 0.0
  %62 = vmatprep.subr.mxu0 0.0
  %63 = vmatpush1.msra.mxu0 0.0
  %64 = vmatprep.subr.mxu0 0.0
  %65 = vmatpush1.msra.mxu0 0.0
  %66 = vmatprep.subr.mxu0 0.0
  %67 = vmatpush1.msra.mxu0 0.0
  %68 = vmatprep.subr.mxu0 0.0
  %69 = vmatpush1.msra.mxu0 0.0
  %70 = vmatprep.subr.mxu0 0.0
  %71 = vmatpush1.msra.mxu0 0.0
  %72 = vmatprep.subr.mxu0 0.0
  %73 = vmatpush1.msra.mxu0 0.0
  %74 = vmatprep.subr.mxu0 0.0
  %75 = vmatpush1.msra.mxu0 0.0
  %76 = vmatprep.subr.mxu0 0.0
  %77 = vmatpush1.msra.mxu0 0.0
  %78 = vmatprep.subr.mxu0 0.0
  %79 = vmatpush1.msra.mxu0 0.0
  %80 = vmatprep.subr.mxu0 0.0
  %81 = vmatpush1.msra.mxu0 0.0
  %82 = vmatprep.subr.mxu0 0.0
  %83 = vmatpush1.msra.mxu0 0.0
  %84 = vmatprep.subr.mxu0 0.0
  %85 = vmatpush1.msra.mxu0 0.0
  %86 = vmatprep.subr.mxu0 0.0
  %87 = vmatpush1.msra.mxu0 0.0
  %88 = vmatprep.subr.mxu0 0.0
  %89 = vmatpush1.msra.mxu0 0.0
  %90 = vmatprep.subr.mxu0 0.0
  %91 = vmatpush1.msra.mxu0 0.0
  %92 = vmatprep.subr.mxu0 0.0
  %93 = vmatpush1.msra.mxu0 0.0
  %94 = vmatprep.subr.mxu0 0.0
  %95 = vmatpush1.msra.mxu0 0.0
  %96 = vmatprep.mubr.f32.mxu0 0.0
  %97 = vmatmul.mubr.f32.gmra.mrb[0].mxu0 %v27
  %v98 = vpop.f32.mrb[0].mxu0
  %v99 = vadd.f32 %v23, %v98
  %v100 = vpop.f32.mrb[0].mxu0
  %101 = vmatprep.mubr.f32.mxu0 0.0
  %102 = vmatmul.mubr.f32.gmra.mrb[0].mxu0 %v30
  %v103 = vpop.f32.mrb[0].mxu0
  %v104 = vadd.f32 %v23, %v103
  %v105 = vpop.f32.mrb[0].mxu0
  %106 = vdwg.mxu0
  %107 = vst [vmem:[%s3] sm:$0xff] %v99
  %108 = vst [vmem:[%s3 + $0x8] sm:$0xff] %v104
  // Predicated region
  $region14: #{trans_img2_forward.48} parent=0 // pred_check
    _
  $region15: #{trans_img2_forward.48} parent=0 // pred_check_branch
    %110 = sbr.rel (0) target = $region17
  $region16: #{trans_img2_forward.48} parent=0 // pred_region
    _
  $region17: #{trans_img2_forward.48} parent=0 // pred_fallthru
    _
  // Predicated region
  $region18: #{trans_img2_forward.48} parent=0 // pred_check
    _
  $region19: #{trans_img2_forward.48} parent=0 // pred_check_branch
    %112 = sbr.rel (0) target = $region21
  $region20: #{trans_img2_forward.48} parent=0 // pred_region
    _
  $region21: #{trans_img2_forward.48} parent=0 // pred_fallthru
    _

// kernel: trans_img2_forward.50
$region0: #{trans_img2_forward.50}
  #allocation0 [shape = 'u32[]', space=smem, size = 0x4, offset = 0x4, fixed_abs, tag = 'smem constant byte address 0x4 - core index']
  #allocation1 [shape = 'u32[144,128]{1,0:T(1,128)}', space=vmem, size = 0x12000, scoped, tag = 'internal scratch']
  %s0 = inlined_call_operand.vmem [shape: f32[16,32], index: 0, kind: input, shape index: {}]
  %s1 = inlined_call_operand.vmem [shape: f32[16,32], index: 1, kind: input, shape index: {}]
  %s2 = inlined_call_operand.vmem [shape: f32[3,32], index: 2, kind: input, shape index: {}]
  %s3 = inlined_call_operand.vmem [shape: f32[16,32], index: 3, kind: output, shape index: {}]
  %s4 = sld [smem:[#allocation0]]
  $region22: #{trans_img2_forward.50} parent=0
    _
  %s6 = ssub.s32 1, %s4
  %s7 = scalar_select 0, %s6, %s4
  // Predicated region
  $region2: #{trans_img2_forward.50} parent=0 // pred_check
    _
  $region3: #{trans_img2_forward.50} parent=0 // pred_check_branch
    %9 = sbr.rel (0) target = $region5
  $region4: #{trans_img2_forward.50} parent=0 // pred_region
    _
  $region5: #{trans_img2_forward.50} parent=0 // pred_fallthru
    _
  // Predicated region
  $region6: #{trans_img2_forward.50} parent=0 // pred_check
    _
  $region7: #{trans_img2_forward.50} parent=0 // pred_check_branch
    %11 = sbr.rel (0) target = $region9
  $region8: #{trans_img2_forward.50} parent=0 // pred_region
    _
  $region9: #{trans_img2_forward.50} parent=0 // pred_fallthru
    _
  // Predicated region
  $region10: #{trans_img2_forward.50} parent=0 // pred_check
    _
  $region11: #{trans_img2_forward.50} parent=0 // pred_check_branch
    %13 = sbr.rel (0) target = $region13
  $region12: #{trans_img2_forward.50} parent=0 // pred_region
    _
  $region13: #{trans_img2_forward.50} parent=0 // pred_fallthru
    _
  %v14 = vld [vmem:[%s0] sm:$0xff]
  %v15 = vld [vmem:[%s0 + $0x8] sm:$0xff]
  %v16 = vld [vmem:[%s1] sm:$0xff]
  %v17 = vld [vmem:[%s1 + $0x8] sm:$0xff]
  %v18 = vld [vmem:[%s2] sm:$0x7]
  %v19 = vlaneseq
  %v20 = vshrl.u32 %v19, 7
  %v21 = vsub.s32 0, %v20
  %v22 = vrot.slane %v18, %v21
  %v23 = vmul.f32 %v14, %v22
  %v24 = vmul.f32 %v15, %v22
  %v25 = vlaneseq
  %v26 = vshrl.u32 %v25, 7
  %v27 = vsub.s32 1, %v26
  %v28 = vrot.slane %v18, %v27
  %v29 = vmul.f32 %v16, %v28
  %v30 = vmul.f32 %v17, %v28
  %v31 = vadd.f32 %v23, %v29
  %v32 = vadd.f32 %v24, %v30
  %v33 = vsub.f32 %v14, %v16
  %v34 = vsub.f32 %v15, %v17
  %v35 = vlaneseq
  %v36 = vshrl.u32 %v35, 7
  %v37 = vsub.s32 2, %v36
  %v38 = vrot.slane %v18, %v37
  %v39 = vmul.f32 %v33, %v38
  %v40 = vmul.f32 %v34, %v38
  %v41 = vadd.f32 %v31, %v39
  %v42 = vadd.f32 %v32, %v40
  %vm43 = vcmask 261120
  %v44 = vsel %vm43, %v41, 0.0
  %45 = vadd.xlane.f32.xlu0 %v44
  %v46 = vpop.xlane.xlu0 %45
  %v47 = vsel %vm43, %v42, 0.0
  %48 = vadd.xlane.f32.xlu0 %v47
  %v49 = vpop.xlane.xlu0 %48
  %v50 = vsub.f32 0.0, %v46
  %v51 = vsub.f32 0.0, %v49
  %v52 = vmul.f32 %v50, 1.442695
  %v53 = vpow.pop %v52
  %v54 = vmul.f32 %v51, 1.442695
  %v55 = vpow.pop %v54
  %v56 = vadd.f32 %v53, 1.0
  %v57 = vadd.f32 %v55, 1.0
  %v58 = vrcp.pop %v56
  %v59 = vmul.f32 1.0, %v58
  %v60 = vrcp.pop %v57
  %v61 = vmul.f32 1.0, %v60
  %v62 = vmul.f32 %v59, %v16
  %v63 = vmul.f32 %v61, %v17
  %v64 = vsub.f32 1.0, %v59
  %v65 = vsub.f32 1.0, %v61
  %v66 = vmul.f32 %v64, %v14
  %v67 = vmul.f32 %v65, %v15
  %v68 = vadd.f32 %v62, %v66
  %v69 = vadd.f32 %v63, %v67
  %vm70 = vcmp.gt.f32.partialorder %v68, 0.0
  %vm71 = vcmp.gt.f32.partialorder %v69, 0.0
  %v72 = vmin.f32 %v68, 0.0
  %v73 = vmin.f32 %v69, 0.0
  %v74 = vmul.f32 %v72, 1.442695
  %v75 = vpow.pop %v74
  %v76 = vmul.f32 %v73, 1.442695
  %v77 = vpow.pop %v76
  %v78 = vsub.f32 %v75, 1.0
  %v79 = vsub.f32 %v77, 1.0
  %v80 = vsel %vm70, %v68, %v78
  %v81 = vsel %vm71, %v69, %v79
  %82 = vst.msk [vmem:[%s3] sm:$0xff] %vm43, %v80
  %83 = vst.msk [vmem:[%s3 + $0x8] sm:$0xff] %vm43, %v81
  // Predicated region
  $region14: #{trans_img2_forward.50} parent=0 // pred_check
    _
  $region15: #{trans_img2_forward.50} parent=0 // pred_check_branch
    %85 = sbr.rel (0) target = $region17
  $region16: #{trans_img2_forward.50} parent=0 // pred_region
    _
  $region17: #{trans_img2_forward.50} parent=0 // pred_fallthru
    _
  // Predicated region
  $region18: #{trans_img2_forward.50} parent=0 // pred_check
    _
  $region19: #{trans_img2_forward.50} parent=0 // pred_check_branch
    %87 = sbr.rel (0) target = $region21
  $region20: #{trans_img2_forward.50} parent=0 // pred_region
    _
  $region21: #{trans_img2_forward.50} parent=0 // pred_fallthru
    _

// kernel: trans_img2_forward.51
$region0: #{trans_img2_forward.51}
  #allocation0 [shape = 'u32[]', space=smem, size = 0x4, offset = 0x4, fixed_abs, tag = 'smem constant byte address 0x4 - core index']
  #allocation1 [shape = 'u32[144,128]{1,0:T(1,128)}', space=vmem, size = 0x12000, scoped, tag = 'internal scratch']
  %s0 = inlined_call_operand.vmem [shape: f32[16,32], index: 0, kind: input, shape index: {}]
  %s1 = inlined_call_operand.vmem [shape: f32[32,64], index: 1, kind: input, shape index: {}]
  %s2 = inlined_call_operand.vmem [shape: f32[1,64], index: 2, kind: input, shape index: {}]
  %s3 = inlined_call_operand.vmem [shape: f32[16,64], index: 3, kind: output, shape index: {}]
  %s4 = sld [smem:[#allocation0]]
  $region22: #{trans_img2_forward.51} parent=0
    _
  %s6 = ssub.s32 1, %s4
  %s7 = scalar_select 0, %s6, %s4
  // Predicated region
  $region2: #{trans_img2_forward.51} parent=0 // pred_check
    _
  $region3: #{trans_img2_forward.51} parent=0 // pred_check_branch
    %9 = sbr.rel (0) target = $region5
  $region4: #{trans_img2_forward.51} parent=0 // pred_region
    _
  $region5: #{trans_img2_forward.51} parent=0 // pred_fallthru
    _
  // Predicated region
  $region6: #{trans_img2_forward.51} parent=0 // pred_check
    _
  $region7: #{trans_img2_forward.51} parent=0 // pred_check_branch
    %11 = sbr.rel (0) target = $region9
  $region8: #{trans_img2_forward.51} parent=0 // pred_region
    _
  $region9: #{trans_img2_forward.51} parent=0 // pred_fallthru
    _
  // Predicated region
  $region10: #{trans_img2_forward.51} parent=0 // pred_check
    _
  $region11: #{trans_img2_forward.51} parent=0 // pred_check_branch
    %13 = sbr.rel (0) target = $region13
  $region12: #{trans_img2_forward.51} parent=0 // pred_region
    _
  $region13: #{trans_img2_forward.51} parent=0 // pred_fallthru
    _
  %v14 = vld [vmem:[%s0] sm:$0xff]
  %v15 = vld [vmem:[%s0 + $0x8] sm:$0xff]
  %v16 = vld [vmem:[%s1] sm:$0xff]
  %v17 = vld [vmem:[%s1 + $0x8] sm:$0xff]
  %v18 = vld [vmem:[%s1 + $0x10] sm:$0xff]
  %v19 = vld [vmem:[%s1 + $0x18] sm:$0xff]
  %v20 = vld [vmem:[%s2] sm:$0x1]
  %v22 = vlaneseq
  %v23 = vshrl.u32 %v22, 7
  %v24 = vsub.s32 0, %v23
  %v25 = vrot.slane %v20, %v24
  %vm27 = vcmask 261120
  %v29 = vsel %vm27, %v14, 0
  %v32 = vsel %vm27, %v15, 0
  %34 = vmatprep.subr.mxu0 0.0
  %35 = vmatpush1.msra.mxu0 %v16
  %36 = vmatprep.subr.mxu0 0.0
  %37 = vmatpush1.msra.mxu0 %v17
  %38 = vmatprep.subr.mxu0 0.0
  %39 = vmatpush1.msra.mxu0 %v18
  %40 = vmatprep.subr.mxu0 0.0
  %41 = vmatpush1.msra.mxu0 %v19
  %42 = vmatprep.subr.mxu0 0.0
  %43 = vmatpush1.msra.mxu0 0.0
  %44 = vmatprep.subr.mxu0 0.0
  %45 = vmatpush1.msra.mxu0 0.0
  %46 = vmatprep.subr.mxu0 0.0
  %47 = vmatpush1.msra.mxu0 0.0
  %48 = vmatprep.subr.mxu0 0.0
  %49 = vmatpush1.msra.mxu0 0.0
  %50 = vmatprep.subr.mxu0 0.0
  %51 = vmatpush1.msra.mxu0 0.0
  %52 = vmatprep.subr.mxu0 0.0
  %53 = vmatpush1.msra.mxu0 0.0
  %54 = vmatprep.subr.mxu0 0.0
  %55 = vmatpush1.msra.mxu0 0.0
  %56 = vmatprep.subr.mxu0 0.0
  %57 = vmatpush1.msra.mxu0 0.0
  %58 = vmatprep.subr.mxu0 0.0
  %59 = vmatpush1.msra.mxu0 0.0
  %60 = vmatprep.subr.mxu0 0.0
  %61 = vmatpush1.msra.mxu0 0.0
  %62 = vmatprep.subr.mxu0 0.0
  %63 = vmatpush1.msra.mxu0 0.0
  %64 = vmatprep.subr.mxu0 0.0
  %65 = vmatpush1.msra.mxu0 0.0
  %66 = vmatprep.subr.mxu0 0.0
  %67 = vmatpush1.msra.mxu0 0.0
  %68 = vmatprep.subr.mxu0 0.0
  %69 = vmatpush1.msra.mxu0 0.0
  %70 = vmatprep.subr.mxu0 0.0
  %71 = vmatpush1.msra.mxu0 0.0
  %72 = vmatprep.subr.mxu0 0.0
  %73 = vmatpush1.msra.mxu0 0.0
  %74 = vmatprep.subr.mxu0 0.0
  %75 = vmatpush1.msra.mxu0 0.0
  %76 = vmatprep.subr.mxu0 0.0
  %77 = vmatpush1.msra.mxu0 0.0
  %78 = vmatprep.subr.mxu0 0.0
  %79 = vmatpush1.msra.mxu0 0.0
  %80 = vmatprep.subr.mxu0 0.0
  %81 = vmatpush1.msra.mxu0 0.0
  %82 = vmatprep.subr.mxu0 0.0
  %83 = vmatpush1.msra.mxu0 0.0
  %84 = vmatprep.subr.mxu0 0.0
  %85 = vmatpush1.msra.mxu0 0.0
  %86 = vmatprep.subr.mxu0 0.0
  %87 = vmatpush1.msra.mxu0 0.0
  %88 = vmatprep.subr.mxu0 0.0
  %89 = vmatpush1.msra.mxu0 0.0
  %90 = vmatprep.subr.mxu0 0.0
  %91 = vmatpush1.msra.mxu0 0.0
  %92 = vmatprep.subr.mxu0 0.0
  %93 = vmatpush1.msra.mxu0 0.0
  %94 = vmatprep.subr.mxu0 0.0
  %95 = vmatpush1.msra.mxu0 0.0
  %96 = vmatprep.subr.mxu0 0.0
  %97 = vmatpush1.msra.mxu0 0.0
  %98 = vmatprep.mubr.f32.mxu0 0.0
  %99 = vmatmul.mubr.f32.gmra.mrb[0].mxu0 %v29
  %v100 = vpop.f32.mrb[0].mxu0
  %v101 = vadd.f32 %v25, %v100
  %v102 = vpop.f32.mrb[0].mxu0
  %103 = vmatprep.mubr.f32.mxu0 0.0
  %104 = vmatmul.mubr.f32.gmra.mrb[0].mxu0 %v32
  %v105 = vpop.f32.mrb[0].mxu0
  %v106 = vadd.f32 %v25, %v105
  %v107 = vpop.f32.mrb[0].mxu0
  %108 = vdwg.mxu0
  %vm109 = vcmask 523264
  %110 = vst.msk [vmem:[%s3] sm:$0xff] %vm109, %v101
  %111 = vst.msk [vmem:[%s3 + $0x8] sm:$0xff] %vm109, %v106
  // Predicated region
  $region14: #{trans_img2_forward.51} parent=0 // pred_check
    _
  $region15: #{trans_img2_forward.51} parent=0 // pred_check_branch
    %113 = sbr.rel (0) target = $region17
  $region16: #{trans_img2_forward.51} parent=0 // pred_region
    _
  $region17: #{trans_img2_forward.51} parent=0 // pred_fallthru
    _
  // Predicated region
  $region18: #{trans_img2_forward.51} parent=0 // pred_check
    _
  $region19: #{trans_img2_forward.51} parent=0 // pred_check_branch
    %115 = sbr.rel (0) target = $region21
  $region20: #{trans_img2_forward.51} parent=0 // pred_region
    _
  $region21: #{trans_img2_forward.51} parent=0 // pred_fallthru
    _

// kernel: trans_img2_forward.53
$region0: #{trans_img2_forward.53}
  #allocation0 [shape = 'u32[]', space=smem, size = 0x4, offset = 0x4, fixed_abs, tag = 'smem constant byte address 0x4 - core index']
  #allocation1 [shape = 'u32[144,128]{1,0:T(1,128)}', space=vmem, size = 0x12000, scoped, tag = 'internal scratch']
  %s0 = inlined_call_operand.vmem [shape: f32[16,16], index: 0, kind: input, shape index: {}]
  %s1 = inlined_call_operand.vmem [shape: f32[16,16], index: 1, kind: input, shape index: {}]
  %s2 = inlined_call_operand.vmem [shape: f32[3,16], index: 2, kind: input, shape index: {}]
  %s3 = inlined_call_operand.vmem [shape: f32[16,16], index: 3, kind: output, shape index: {}]
  %s4 = sld [smem:[#allocation0]]
  $region22: #{trans_img2_forward.53} parent=0
    _
  %s6 = ssub.s32 1, %s4
  %s7 = scalar_select 0, %s6, %s4
  // Predicated region
  $region2: #{trans_img2_forward.53} parent=0 // pred_check
    _
  $region3: #{trans_img2_forward.53} parent=0 // pred_check_branch
    %9 = sbr.rel (0) target = $region5
  $region4: #{trans_img2_forward.53} parent=0 // pred_region
    _
  $region5: #{trans_img2_forward.53} parent=0 // pred_fallthru
    _
  // Predicated region
  $region6: #{trans_img2_forward.53} parent=0 // pred_check
    _
  $region7: #{trans_img2_forward.53} parent=0 // pred_check_branch
    %11 = sbr.rel (0) target = $region9
  $region8: #{trans_img2_forward.53} parent=0 // pred_region
    _
  $region9: #{trans_img2_forward.53} parent=0 // pred_fallthru
    _
  // Predicated region
  $region10: #{trans_img2_forward.53} parent=0 // pred_check
    _
  $region11: #{trans_img2_forward.53} parent=0 // pred_check_branch
    %13 = sbr.rel (0) target = $region13
  $region12: #{trans_img2_forward.53} parent=0 // pred_region
    _
  $region13: #{trans_img2_forward.53} parent=0 // pred_fallthru
    _
  %v14 = vld [vmem:[%s0] sm:$0xff]
  %v15 = vld [vmem:[%s0 + $0x8] sm:$0xff]
  %v16 = vld [vmem:[%s1] sm:$0xff]
  %v17 = vld [vmem:[%s1 + $0x8] sm:$0xff]
  %v18 = vld [vmem:[%s2] sm:$0x7]
  %v19 = vlaneseq
  %v20 = vshrl.u32 %v19, 7
  %v21 = vsub.s32 0, %v20
  %v22 = vrot.slane %v18, %v21
  %v23 = vmul.f32 %v14, %v22
  %v24 = vmul.f32 %v15, %v22
  %v25 = vlaneseq
  %v26 = vshrl.u32 %v25, 7
  %v27 = vsub.s32 1, %v26
  %v28 = vrot.slane %v18, %v27
  %v29 = vmul.f32 %v16, %v28
  %v30 = vmul.f32 %v17, %v28
  %v31 = vadd.f32 %v23, %v29
  %v32 = vadd.f32 %v24, %v30
  %v33 = vsub.f32 %v14, %v16
  %v34 = vsub.f32 %v15, %v17
  %v35 = vlaneseq
  %v36 = vshrl.u32 %v35, 7
  %v37 = vsub.s32 2, %v36
  %v38 = vrot.slane %v18, %v37
  %v39 = vmul.f32 %v33, %v38
  %v40 = vmul.f32 %v34, %v38
  %v41 = vadd.f32 %v31, %v39
  %v42 = vadd.f32 %v32, %v40
  %vm43 = vcmask 130048
  %v44 = vsel %vm43, %v41, 0.0
  %45 = vadd.xlane.f32.xlu0 %v44
  %v46 = vpop.xlane.xlu0 %45
  %v47 = vsel %vm43, %v42, 0.0
  %48 = vadd.xlane.f32.xlu0 %v47
  %v49 = vpop.xlane.xlu0 %48
  %v50 = vsub.f32 0.0, %v46
  %v51 = vsub.f32 0.0, %v49
  %v52 = vmul.f32 %v50, 1.442695
  %v53 = vpow.pop %v52
  %v54 = vmul.f32 %v51, 1.442695
  %v55 = vpow.pop %v54
  %v56 = vadd.f32 %v53, 1.0
  %v57 = vadd.f32 %v55, 1.0
  %v58 = vrcp.pop %v56
  %v59 = vmul.f32 1.0, %v58
  %v60 = vrcp.pop %v57
  %v61 = vmul.f32 1.0, %v60
  %v62 = vmul.f32 %v59, %v16
  %v63 = vmul.f32 %v61, %v17
  %v64 = vsub.f32 1.0, %v59
  %v65 = vsub.f32 1.0, %v61
  %v66 = vmul.f32 %v64, %v14
  %v67 = vmul.f32 %v65, %v15
  %v68 = vadd.f32 %v62, %v66
  %v69 = vadd.f32 %v63, %v67
  %70 = vst.msk [vmem:[%s3] sm:$0xff] %vm43, %v68
  %71 = vst.msk [vmem:[%s3 + $0x8] sm:$0xff] %vm43, %v69
  // Predicated region
  $region14: #{trans_img2_forward.53} parent=0 // pred_check
    _
  $region15: #{trans_img2_forward.53} parent=0 // pred_check_branch
    %73 = sbr.rel (0) target = $region17
  $region16: #{trans_img2_forward.53} parent=0 // pred_region
    _
  $region17: #{trans_img2_forward.53} parent=0 // pred_fallthru
    _
  // Predicated region
  $region18: #{trans_img2_forward.53} parent=0 // pred_check
    _
  $region19: #{trans_img2_forward.53} parent=0 // pred_check_branch
    %75 = sbr.rel (0) target = $region21
  $region20: #{trans_img2_forward.53} parent=0 // pred_region
    _
  $region21: #{trans_img2_forward.53} parent=0 // pred_fallthru
    _

// kernel: trans_img2_forward.52
$region0: #{trans_img2_forward.52}
  #allocation0 [shape = 'u32[]', space=smem, size = 0x4, offset = 0x4, fixed_abs, tag = 'smem constant byte address 0x4 - core index']
  #allocation1 [shape = 'u32[144,128]{1,0:T(1,128)}', space=vmem, size = 0x12000, scoped, tag = 'internal scratch']
  #allocation2 [shape = 'f32[16,1]{1,0:T(8,128)}', space=vmem, size = 0x2000, scoped, tag = 'scratch operand']
  #allocation3 [shape = 'f32[16,1]{1,0:T(8,128)}', space=vmem, size = 0x2000, scoped, tag = 'scratch operand']
  #allocation4 [shape = 'f32[16,16]{1,0:T(8,128)}', space=vmem, size = 0x2000, scoped, tag = 'scratch operand']
  %s0 = inlined_call_operand.vmem [shape: f32[16,16], index: 0, kind: input, shape index: {}]
  %s1 = inlined_call_operand.vmem [shape: f32[16,16], index: 1, kind: input, shape index: {}]
  %s2 = inlined_call_operand.vmem [shape: f32[16,16], index: 2, kind: input, shape index: {}]
  %s3 = inlined_call_operand.vmem [shape: f32[16,16], index: 3, kind: input, shape index: {}]
  %s4 = inlined_call_operand.vmem [shape: f32[16,16], index: 4, kind: output, shape index: {}]
  %s5 = sld [smem:[#allocation0]]
  $region34: #{trans_img2_forward.52} parent=0
    _
  %s7 = ssub.s32 1, %s5
  %s8 = scalar_select 0, %s7, %s5
  // Predicated region
  $region2: #{trans_img2_forward.52} parent=0 // pred_check
    _
  $region3: #{trans_img2_forward.52} parent=0 // pred_check_branch
    %10 = sbr.rel (0) target = $region5
  $region4: #{trans_img2_forward.52} parent=0 // pred_region
    _
  $region5: #{trans_img2_forward.52} parent=0 // pred_fallthru
    _
  // Predicated region
  $region6: #{trans_img2_forward.52} parent=0 // pred_check
    _
  $region7: #{trans_img2_forward.52} parent=0 // pred_check_branch
    %12 = sbr.rel (0) target = $region9
  $region8: #{trans_img2_forward.52} parent=0 // pred_region
    _
  $region9: #{trans_img2_forward.52} parent=0 // pred_fallthru
    _
  // Predicated region
  $region10: #{trans_img2_forward.52} parent=0 // pred_check
    _
  $region11: #{trans_img2_forward.52} parent=0 // pred_check_branch
    %14 = sbr.rel (0) target = $region13
  $region12: #{trans_img2_forward.52} parent=0 // pred_region
    _
  $region13: #{trans_img2_forward.52} parent=0 // pred_fallthru
    _
  // Predicated region
  $region14: #{trans_img2_forward.52} parent=0 // pred_check
    _
  $region15: #{trans_img2_forward.52} parent=0 // pred_check_branch
    %16 = sbr.rel (0) target = $region17
  $region16: #{trans_img2_forward.52} parent=0 // pred_region
    _
  $region17: #{trans_img2_forward.52} parent=0 // pred_fallthru
    _
  %p17 = scmp.eq.s32.totalorder 0, 0
  // Predicated region
  $region18: #{trans_img2_forward.52} parent=0 // pred_check
    %p18 = pneg %p17
  $region19: #{trans_img2_forward.52} parent=0 // pred_check_branch
    %20 = sbr.rel (%p18) target = $region21
  $region20: #{trans_img2_forward.52} parent=0 // pred_region
    %vm21 = vcmask 7168
    %22 = vst.msk [vmem:[#allocation2] sm:$0xff] %vm21, -1e+30
    %23 = vst.msk [vmem:[#allocation2 + $0x8] sm:$0xff] %vm21, -1e+30
    %24 = vst.msk [vmem:[#allocation3] sm:$0xff] %vm21, 0.0
    %25 = vst.msk [vmem:[#allocation3 + $0x8] sm:$0xff] %vm21, 0.0
    %vm26 = vcmask 130048
    %27 = vst.msk [vmem:[#allocation4] sm:$0xff] %vm26, 0.0
    %28 = vst.msk [vmem:[#allocation4 + $0x8] sm:$0xff] %vm26, 0.0
  $region21: #{trans_img2_forward.52} parent=0 // pred_fallthru
    _
  %v29 = vld [vmem:[%s0] sm:$0xff]
  %v30 = vld [vmem:[%s0 + $0x8] sm:$0xff]
  %v31 = vmul.f32 %v29, 0.25
  %v32 = vmul.f32 %v30, 0.25
  %v33 = vld [vmem:[%s1] sm:$0xff]
  %v34 = vld [vmem:[%s1 + $0x8] sm:$0xff]
  %vm35 = vcmask 130048
  %v37 = vsel %vm35, %v31, 0
  %v40 = vsel %vm35, %v32, 0
  %v43 = vsel %vm35, %v33, 0
  %v46 = vsel %vm35, %v34, 0
  %48 = vmatprep.subr.mxu0 0.0
  %49 = vmatpush1.xpose.msra.mxu0 %v43
  %50 = vmatprep.subr.mxu0 0.0
  %51 = vmatpush1.xpose.msra.mxu0 %v46
  %52 = vmatprep.subr.mxu0 0.0
  %53 = vmatpush1.xpose.msra.mxu0 0.0
  %54 = vmatprep.subr.mxu0 0.0
  %55 = vmatpush1.xpose.msra.mxu0 0.0
  %56 = vmatprep.subr.mxu0 0.0
  %57 = vmatpush1.xpose.msra.mxu0 0.0
  %58 = vmatprep.subr.mxu0 0.0
  %59 = vmatpush1.xpose.msra.mxu0 0.0
  %60 = vmatprep.subr.mxu0 0.0
  %61 = vmatpush1.xpose.msra.mxu0 0.0
  %62 = vmatprep.subr.mxu0 0.0
  %63 = vmatpush1.xpose.msra.mxu0 0.0
  %64 = vmatprep.subr.mxu0 0.0
  %65 = vmatpush1.xpose.msra.mxu0 0.0
  %66 = vmatprep.subr.mxu0 0.0
  %67 = vmatpush1.xpose.msra.mxu0 0.0
  %68 = vmatprep.subr.mxu0 0.0
  %69 = vmatpush1.xpose.msra.mxu0 0.0
  %70 = vmatprep.subr.mxu0 0.0
  %71 = vmatpush1.xpose.msra.mxu0 0.0
  %72 = vmatprep.subr.mxu0 0.0
  %73 = vmatpush1.xpose.msra.mxu0 0.0
  %74 = vmatprep.subr.mxu0 0.0
  %75 = vmatpush1.xpose.msra.mxu0 0.0
  %76 = vmatprep.subr.mxu0 0.0
  %77 = vmatpush1.xpose.msra.mxu0 0.0
  %78 = vmatprep.subr.mxu0 0.0
  %79 = vmatpush1.xpose.msra.mxu0 0.0
  %80 = vmatprep.subr.mxu0 0.0
  %81 = vmatpush1.xpose.msra.mxu0 0.0
  %82 = vmatprep.subr.mxu0 0.0
  %83 = vmatpush1.xpose.msra.mxu0 0.0
  %84 = vmatprep.subr.mxu0 0.0
  %85 = vmatpush1.xpose.msra.mxu0 0.0
  %86 = vmatprep.subr.mxu0 0.0
  %87 = vmatpush1.xpose.msra.mxu0 0.0
  %88 = vmatprep.subr.mxu0 0.0
  %89 = vmatpush1.xpose.msra.mxu0 0.0
  %90 = vmatprep.subr.mxu0 0.0
  %91 = vmatpush1.xpose.msra.mxu0 0.0
  %92 = vmatprep.subr.mxu0 0.0
  %93 = vmatpush1.xpose.msra.mxu0 0.0
  %94 = vmatprep.subr.mxu0 0.0
  %95 = vmatpush1.xpose.msra.mxu0 0.0
  %96 = vmatprep.subr.mxu0 0.0
  %97 = vmatpush1.xpose.msra.mxu0 0.0
  %98 = vmatprep.subr.mxu0 0.0
  %99 = vmatpush1.xpose.msra.mxu0 0.0
  %100 = vmatprep.subr.mxu0 0.0
  %101 = vmatpush1.xpose.msra.mxu0 0.0
  %102 = vmatprep.subr.mxu0 0.0
  %103 = vmatpush1.xpose.msra.mxu0 0.0
  %104 = vmatprep.subr.mxu0 0.0
  %105 = vmatpush1.xpose.msra.mxu0 0.0
  %106 = vmatprep.subr.mxu0 0.0
  %107 = vmatpush1.xpose.msra.mxu0 0.0
  %108 = vmatprep.subr.mxu0 0.0
  %109 = vmatpush1.xpose.msra.mxu0 0.0
  %110 = vmatprep.subr.mxu0 0.0
  %111 = vmatpush1.xpose.msra.mxu0 0.0
  %112 = vmatprep.mubr.f32.mxu0 0.0
  %113 = vmatmul.mubr.f32.gmra.mrb[0].mxu0 %v37
  %v114 = vpop.f32.mrb[0].mxu0
  %v115 = vadd.f32 0.0, %v114
  %v116 = vpop.f32.mrb[0].mxu0
  %117 = vmatprep.mubr.f32.mxu0 0.0
  %118 = vmatmul.mubr.f32.gmra.mrb[0].mxu0 %v40
  %v119 = vpop.f32.mrb[0].mxu0
  %v120 = vadd.f32 0.0, %v119
  %v121 = vpop.f32.mrb[0].mxu0
  %122 = vdwg.mxu0
  %v123 = vld [vmem:[%s3] sm:$0xff]
  %v124 = vld [vmem:[%s3 + $0x8] sm:$0xff]
  %vm125 = vcmp.gt.f32.partialorder %v123, 0.0
  %vm126 = vcmp.gt.f32.partialorder %v124, 0.0
  %v127 = vsel %vm125, %v115, -1e+30
  %v128 = vsel %vm126, %v120, -1e+30
  %v129 = vld [vmem:[#allocation2] sm:$0xff]
  %v130 = vld [vmem:[#allocation2 + $0x8] sm:$0xff]
  %v131 = vsel %vm35, %v127, -inf
  %132 = vmax.xlane.f32.xlu0 %v131
  %v133 = vpop.xlane.xlu0 %132
  %v134 = vsel %vm35, %v128, -inf
  %135 = vmax.xlane.f32.xlu0 %v134
  %v136 = vpop.xlane.xlu0 %135
  %v137 = vmax.f32 %v129, %v133
  %v138 = vmax.f32 %v130, %v136
  %v139 = vsub.f32 %v129, %v137
  %v140 = vsub.f32 %v130, %v138
  %v141 = vmul.f32 %v139, 1.442695
  %v142 = vpow.pop %v141
  %v143 = vmul.f32 %v140, 1.442695
  %v144 = vpow.pop %v143
  %146 = vset.pattern.permute.xlu0 0
  %147 = vperm.xlu0 %146, %v137
  %v148 = vpop.permute.xlu0 %147
  %151 = vset.pattern.permute.xlu0 0
  %152 = vperm.xlu0 %151, %v138
  %v153 = vpop.permute.xlu0 %152
  %v155 = vsub.f32 %v127, %v148
  %v156 = vsub.f32 %v128, %v153
  %v157 = vmul.f32 %v155, 1.442695
  %v158 = vpow.pop %v157
  %v159 = vmul.f32 %v156, 1.442695
  %v160 = vpow.pop %v159
  %v161 = vmul.f32 %v158, %v123
  %v162 = vmul.f32 %v160, %v124
  %v163 = vld [vmem:[#allocation3] sm:$0xff]
  %v164 = vld [vmem:[#allocation3 + $0x8] sm:$0xff]
  %v165 = vmul.f32 %v142, %v163
  %v166 = vmul.f32 %v144, %v164
  %v167 = vsel %vm35, %v161, 0.0
  %168 = vadd.xlane.f32.xlu0 %v167
  %v169 = vpop.xlane.xlu0 %168
  %v170 = vsel %vm35, %v162, 0.0
  %171 = vadd.xlane.f32.xlu0 %v170
  %v172 = vpop.xlane.xlu0 %171
  %v173 = vadd.f32 %v165, %v169
  %v174 = vadd.f32 %v166, %v172
  %vm175 = vcmask 7168
  %176 = vst.msk [vmem:[#allocation3] sm:$0xff] %vm175, %v173
  %177 = vst.msk [vmem:[#allocation3 + $0x8] sm:$0xff] %vm175, %v174
  %v178 = vld [vmem:[#allocation4] sm:$0xff]
  %v179 = vld [vmem:[#allocation4 + $0x8] sm:$0xff]
  %181 = vset.pattern.permute.xlu0 0
  %182 = vperm.xlu0 %181, %v142
  %v183 = vpop.permute.xlu0 %182
  %186 = vset.pattern.permute.xlu0 0
  %187 = vperm.xlu0 %186, %v144
  %v188 = vpop.permute.xlu0 %187
  %v190 = vmul.f32 %v183, %v178
  %v191 = vmul.f32 %v188, %v179
  %v192 = vld [vmem:[%s2] sm:$0xff]
  %v193 = vld [vmem:[%s2 + $0x8] sm:$0xff]
  %v195 = vsel %vm35, %v161, 0
  %v198 = vsel %vm35, %v162, 0
  %200 = vmatprep.subr.mxu0 0.0
  %201 = vmatpush1.msra.mxu0 %v192
  %202 = vmatprep.subr.mxu0 0.0
  %203 = vmatpush1.msra.mxu0 %v193
  %204 = vmatprep.subr.mxu0 0.0
  %205 = vmatpush1.msra.mxu0 0.0
  %206 = vmatprep.subr.mxu0 0.0
  %207 = vmatpush1.msra.mxu0 0.0
  %208 = vmatprep.subr.mxu0 0.0
  %209 = vmatpush1.msra.mxu0 0.0
  %210 = vmatprep.subr.mxu0 0.0
  %211 = vmatpush1.msra.mxu0 0.0
  %212 = vmatprep.subr.mxu0 0.0
  %213 = vmatpush1.msra.mxu0 0.0
  %214 = vmatprep.subr.mxu0 0.0
  %215 = vmatpush1.msra.mxu0 0.0
  %216 = vmatprep.subr.mxu0 0.0
  %217 = vmatpush1.msra.mxu0 0.0
  %218 = vmatprep.subr.mxu0 0.0
  %219 = vmatpush1.msra.mxu0 0.0
  %220 = vmatprep.subr.mxu0 0.0
  %221 = vmatpush1.msra.mxu0 0.0
  %222 = vmatprep.subr.mxu0 0.0
  %223 = vmatpush1.msra.mxu0 0.0
  %224 = vmatprep.subr.mxu0 0.0
  %225 = vmatpush1.msra.mxu0 0.0
  %226 = vmatprep.subr.mxu0 0.0
  %227 = vmatpush1.msra.mxu0 0.0
  %228 = vmatprep.subr.mxu0 0.0
  %229 = vmatpush1.msra.mxu0 0.0
  %230 = vmatprep.subr.mxu0 0.0
  %231 = vmatpush1.msra.mxu0 0.0
  %232 = vmatprep.subr.mxu0 0.0
  %233 = vmatpush1.msra.mxu0 0.0
  %234 = vmatprep.subr.mxu0 0.0
  %235 = vmatpush1.msra.mxu0 0.0
  %236 = vmatprep.subr.mxu0 0.0
  %237 = vmatpush1.msra.mxu0 0.0
  %238 = vmatprep.subr.mxu0 0.0
  %239 = vmatpush1.msra.mxu0 0.0
  %240 = vmatprep.subr.mxu0 0.0
  %241 = vmatpush1.msra.mxu0 0.0
  %242 = vmatprep.subr.mxu0 0.0
  %243 = vmatpush1.msra.mxu0 0.0
  %244 = vmatprep.subr.mxu0 0.0
  %245 = vmatpush1.msra.mxu0 0.0
  %246 = vmatprep.subr.mxu0 0.0
  %247 = vmatpush1.msra.mxu0 0.0
  %248 = vmatprep.subr.mxu0 0.0
  %249 = vmatpush1.msra.mxu0 0.0
  %250 = vmatprep.subr.mxu0 0.0
  %251 = vmatpush1.msra.mxu0 0.0
  %252 = vmatprep.subr.mxu0 0.0
  %253 = vmatpush1.msra.mxu0 0.0
  %254 = vmatprep.subr.mxu0 0.0
  %255 = vmatpush1.msra.mxu0 0.0
  %256 = vmatprep.subr.mxu0 0.0
  %257 = vmatpush1.msra.mxu0 0.0
  %258 = vmatprep.subr.mxu0 0.0
  %259 = vmatpush1.msra.mxu0 0.0
  %260 = vmatprep.subr.mxu0 0.0
  %261 = vmatpush1.msra.mxu0 0.0
  %262 = vmatprep.subr.mxu0 0.0
  %263 = vmatpush1.msra.mxu0 0.0
  %264 = vmatprep.mubr.f32.mxu0 0.0
  %265 = vmatmul.mubr.f32.gmra.mrb[0].mxu0 %v195
  %v266 = vpop.f32.mrb[0].mxu0
  %v267 = vadd.f32 0.0, %v266
  %v268 = vpop.f32.mrb[0].mxu0
  %269 = vmatprep.mubr.f32.mxu0 0.0
  %270 = vmatmul.mubr.f32.gmra.mrb[0].mxu0 %v198
  %v271 = vpop.f32.mrb[0].mxu0
  %v272 = vadd.f32 0.0, %v271
  %v273 = vpop.f32.mrb[0].mxu0
  %274 = vdwg.mxu0
  %v275 = vadd.f32 %v190, %v267
  %v276 = vadd.f32 %v191, %v272
  %277 = vst.msk [vmem:[#allocation4] sm:$0xff] %vm35, %v275
  %278 = vst.msk [vmem:[#allocation4 + $0x8] sm:$0xff] %vm35, %v276
  %279 = vst.msk [vmem:[#allocation2] sm:$0xff] %vm175, %v137
  %280 = vst.msk [vmem:[#allocation2 + $0x8] sm:$0xff] %vm175, %v138
  // Predicated region
  $region22: #{trans_img2_forward.52} parent=0 // pred_check
    %p281 = pneg %p17
  $region23: #{trans_img2_forward.52} parent=0 // pred_check_branch
    %283 = sbr.rel (%p281) target = $region25
  $region24: #{trans_img2_forward.52} parent=0 // pred_region
    %v284 = vld [vmem:[#allocation3] sm:$0xff]
    %v285 = vld [vmem:[#allocation3 + $0x8] sm:$0xff]
    %vm286 = vcmp.gt.f32.partialorder %v284, 0.0
    %vm287 = vcmp.gt.f32.partialorder %v285, 0.0
    %v288 = vsel %vm286, %v284, 1.0
    %v289 = vsel %vm287, %v285, 1.0
    %v290 = vld [vmem:[#allocation4] sm:$0xff]
    %v291 = vld [vmem:[#allocation4 + $0x8] sm:$0xff]
    %293 = vset.pattern.permute.xlu0 0
    %294 = vperm.xlu0 %293, %v288
    %v295 = vpop.permute.xlu0 %294
    %298 = vset.pattern.permute.xlu0 0
    %299 = vperm.xlu0 %298, %v289
    %v300 = vpop.permute.xlu0 %299
    %v302 = vrcp.pop %v295
    %v303 = vmul.f32 %v290, %v302
    %v304 = vrcp.pop %v300
    %v305 = vmul.f32 %v291, %v304
    %306 = vst.msk [vmem:[%s4] sm:$0xff] %vm35, %v303
    %307 = vst.msk [vmem:[%s4 + $0x8] sm:$0xff] %vm35, %v305
  $region25: #{trans_img2_forward.52} parent=0 // pred_fallthru
    _
  // Predicated region
  $region26: #{trans_img2_forward.52} parent=0 // pred_check
    _
  $region27: #{trans_img2_forward.52} parent=0 // pred_check_branch
    %309 = sbr.rel (0) target = $region29
  $region28: #{trans_img2_forward.52} parent=0 // pred_region
    _
  $region29: #{trans_img2_forward.52} parent=0 // pred_fallthru
    _
  // Predicated region
  $region30: #{trans_img2_forward.52} parent=0 // pred_check
    _
  $region31: #{trans_img2_forward.52} parent=0 // pred_check_branch
    %311 = sbr.rel (0) target = $region33
  $region32: #{trans_img2_forward.52} parent=0 // pred_region
    _
  $region33: #{trans_img2_forward.52} parent=0 // pred_fallthru
    _

// kernel: trans_img2_forward.59
$region0: #{trans_img2_forward.59}
  #allocation0 [shape = 'u32[]', space=smem, size = 0x4, offset = 0x4, fixed_abs, tag = 'smem constant byte address 0x4 - core index']
  #allocation1 [shape = 'u32[144,128]{1,0:T(1,128)}', space=vmem, size = 0x12000, scoped, tag = 'internal scratch']
  %s0 = inlined_call_operand.vmem [shape: f32[16,16], index: 0, kind: input, shape index: {}]
  %s1 = inlined_call_operand.vmem [shape: f32[16,16], index: 1, kind: input, shape index: {}]
  %s2 = inlined_call_operand.vmem [shape: f32[3,16], index: 2, kind: input, shape index: {}]
  %s3 = inlined_call_operand.hbm [shape: f32[16,16], index: 3, kind: output, shape index: {}]
  %s4 = sld [smem:[#allocation0]]
  $region22: #{trans_img2_forward.59} parent=0
    _
  %s6 = ssub.s32 1, %s4
  %s7 = scalar_select 0, %s6, %s4
  $region1: #{trans_img2_forward.59} parent=0
    #allocation2 [shape = 'u8[8192]{0}', space=vmem, size = 0x2000, scoped, tag = 'output window, operand 0, single buffered']
    #allocation3 [shape = 's32[1]{0}', space=sflag, size = 0x4, scoped, tag = 'scoped memory for trans_img2_forward.59']
    %8 = vsyncpa [#allocation3], 0
    // Predicated region
    $region2: #{trans_img2_forward.59} parent=1 // pred_check
      _
    $region3: #{trans_img2_forward.59} parent=1 // pred_check_branch
      %10 = sbr.rel (0) target = $region5
    $region4: #{trans_img2_forward.59} parent=1 // pred_region
      _
    $region5: #{trans_img2_forward.59} parent=1 // pred_fallthru
      _
    // Predicated region
    $region6: #{trans_img2_forward.59} parent=1 // pred_check
      _
    $region7: #{trans_img2_forward.59} parent=1 // pred_check_branch
      %12 = sbr.rel (0) target = $region9
    $region8: #{trans_img2_forward.59} parent=1 // pred_region
      _
    $region9: #{trans_img2_forward.59} parent=1 // pred_fallthru
      _
    // Predicated region
    $region10: #{trans_img2_forward.59} parent=1 // pred_check
      _
    $region11: #{trans_img2_forward.59} parent=1 // pred_check_branch
      %14 = sbr.rel (0) target = $region13
    $region12: #{trans_img2_forward.59} parent=1 // pred_region
      _
    $region13: #{trans_img2_forward.59} parent=1 // pred_fallthru
      _
    %v15 = vld [vmem:[%s0] sm:$0xff]
    %v16 = vld [vmem:[%s0 + $0x8] sm:$0xff]
    %v17 = vld [vmem:[%s1] sm:$0xff]
    %v18 = vld [vmem:[%s1 + $0x8] sm:$0xff]
    %v19 = vld [vmem:[%s2] sm:$0x7]
    %v20 = vlaneseq
    %v21 = vshrl.u32 %v20, 7
    %v22 = vsub.s32 0, %v21
    %v23 = vrot.slane %v19, %v22
    %v24 = vmul.f32 %v15, %v23
    %v25 = vmul.f32 %v16, %v23
    %v26 = vlaneseq
    %v27 = vshrl.u32 %v26, 7
    %v28 = vsub.s32 1, %v27
    %v29 = vrot.slane %v19, %v28
    %v30 = vmul.f32 %v17, %v29
    %v31 = vmul.f32 %v18, %v29
    %v32 = vadd.f32 %v24, %v30
    %v33 = vadd.f32 %v25, %v31
    %v34 = vsub.f32 %v15, %v17
    %v35 = vsub.f32 %v16, %v18
    %v36 = vlaneseq
    %v37 = vshrl.u32 %v36, 7
    %v38 = vsub.s32 2, %v37
    %v39 = vrot.slane %v19, %v38
    %v40 = vmul.f32 %v34, %v39
    %v41 = vmul.f32 %v35, %v39
    %v42 = vadd.f32 %v32, %v40
    %v43 = vadd.f32 %v33, %v41
    %vm44 = vcmask 130048
    %v45 = vsel %vm44, %v42, 0.0
    %46 = vadd.xlane.f32.xlu0 %v45
    %v47 = vpop.xlane.xlu0 %46
    %v48 = vsel %vm44, %v43, 0.0
    %49 = vadd.xlane.f32.xlu0 %v48
    %v50 = vpop.xlane.xlu0 %49
    %v51 = vsub.f32 0.0, %v47
    %v52 = vsub.f32 0.0, %v50
    %v53 = vmul.f32 %v51, 1.442695
    %v54 = vpow.pop %v53
    %v55 = vmul.f32 %v52, 1.442695
    %v56 = vpow.pop %v55
    %v57 = vadd.f32 %v54, 1.0
    %v58 = vadd.f32 %v56, 1.0
    %v59 = vrcp.pop %v57
    %v60 = vmul.f32 1.0, %v59
    %v61 = vrcp.pop %v58
    %v62 = vmul.f32 1.0, %v61
    %v63 = vmul.f32 %v60, %v17
    %v64 = vmul.f32 %v62, %v18
    %v65 = vsub.f32 1.0, %v60
    %v66 = vsub.f32 1.0, %v62
    %v67 = vmul.f32 %v65, %v15
    %v68 = vmul.f32 %v66, %v16
    %v69 = vadd.f32 %v63, %v67
    %v70 = vadd.f32 %v64, %v68
    %71 = vst.msk [vmem:[#allocation2] sm:$0xff] %vm44, %v69
    %72 = vst.msk [vmem:[#allocation2 + $0x8] sm:$0xff] %vm44, %v70
    // Predicated region
    $region14: #{trans_img2_forward.59} parent=1 // pred_check
      _
    $region15: #{trans_img2_forward.59} parent=1 // pred_check_branch
      %74 = sbr.rel (0) target = $region17
    $region16: #{trans_img2_forward.59} parent=1 // pred_region
      %s76 = ssub.s32 256, 256
      %77 = vsyncadd [#allocation3], %s76
      %s78 = sshll.u32 [#allocation2], 4
      %s79 = int_to_ptr.vmem [resolvable:$true] %s78
      %84 = dma.vmem_to_hbm [thread:$0]  %s79, 256, %s3, [#allocation3], 128, 128, 8
    $region17: #{trans_img2_forward.59} parent=1 // pred_fallthru
      _
    // Predicated region
    $region18: #{trans_img2_forward.59} parent=1 // pred_check
      _
    $region19: #{trans_img2_forward.59} parent=1 // pred_check_branch
      %86 = sbr.rel (0) target = $region21
    $region20: #{trans_img2_forward.59} parent=1 // pred_region
      %87 = dma.done [#allocation3], 256
    $region21: #{trans_img2_forward.59} parent=1 // pred_fallthru
      _
    %88 = vsyncpa [#allocation3], 1

// kernel: trans_img2_forward.62
$region0: #{trans_img2_forward.62}
  #allocation0 [shape = 'u32[]', space=smem, size = 0x4, offset = 0x4, fixed_abs, tag = 'smem constant byte address 0x4 - core index']
  #allocation1 [shape = 'u32[144,128]{1,0:T(1,128)}', space=vmem, size = 0x12000, scoped, tag = 'internal scratch']
  %s0 = inlined_call_operand.vmem [shape: f32[16,16], index: 0, kind: input, shape index: {}]
  %s1 = inlined_call_operand.vmem [shape: f32[16,16], index: 1, kind: input, shape index: {}]
  %s2 = inlined_call_operand.vmem [shape: f32[3,16], index: 2, kind: input, shape index: {}]
  %s3 = inlined_call_operand.vmem [shape: f32[16,16], index: 3, kind: output, shape index: {}]
  %s4 = sld [smem:[#allocation0]]
  $region22: #{trans_img2_forward.62} parent=0
    _
  %s6 = ssub.s32 1, %s4
  %s7 = scalar_select 0, %s6, %s4
  // Predicated region
  $region2: #{trans_img2_forward.62} parent=0 // pred_check
    _
  $region3: #{trans_img2_forward.62} parent=0 // pred_check_branch
    %9 = sbr.rel (0) target = $region5
  $region4: #{trans_img2_forward.62} parent=0 // pred_region
    _
  $region5: #{trans_img2_forward.62} parent=0 // pred_fallthru
    _
  // Predicated region
  $region6: #{trans_img2_forward.62} parent=0 // pred_check
    _
  $region7: #{trans_img2_forward.62} parent=0 // pred_check_branch
    %11 = sbr.rel (0) target = $region9
  $region8: #{trans_img2_forward.62} parent=0 // pred_region
    _
  $region9: #{trans_img2_forward.62} parent=0 // pred_fallthru
    _
  // Predicated region
  $region10: #{trans_img2_forward.62} parent=0 // pred_check
    _
  $region11: #{trans_img2_forward.62} parent=0 // pred_check_branch
    %13 = sbr.rel (0) target = $region13
  $region12: #{trans_img2_forward.62} parent=0 // pred_region
    _
  $region13: #{trans_img2_forward.62} parent=0 // pred_fallthru
    _
  %v14 = vld [vmem:[%s0] sm:$0xff]
  %v15 = vld [vmem:[%s0 + $0x8] sm:$0xff]
  %v16 = vld [vmem:[%s1] sm:$0xff]
  %v17 = vld [vmem:[%s1 + $0x8] sm:$0xff]
  %v18 = vld [vmem:[%s2] sm:$0x7]
  %v19 = vlaneseq
  %v20 = vshrl.u32 %v19, 7
  %v21 = vsub.s32 0, %v20
  %v22 = vrot.slane %v18, %v21
  %v23 = vmul.f32 %v14, %v22
  %v24 = vmul.f32 %v15, %v22
  %v25 = vlaneseq
  %v26 = vshrl.u32 %v25, 7
  %v27 = vsub.s32 1, %v26
  %v28 = vrot.slane %v18, %v27
  %v29 = vmul.f32 %v16, %v28
  %v30 = vmul.f32 %v17, %v28
  %v31 = vadd.f32 %v23, %v29
  %v32 = vadd.f32 %v24, %v30
  %v33 = vsub.f32 %v14, %v16
  %v34 = vsub.f32 %v15, %v17
  %v35 = vlaneseq
  %v36 = vshrl.u32 %v35, 7
  %v37 = vsub.s32 2, %v36
  %v38 = vrot.slane %v18, %v37
  %v39 = vmul.f32 %v33, %v38
  %v40 = vmul.f32 %v34, %v38
  %v41 = vadd.f32 %v31, %v39
  %v42 = vadd.f32 %v32, %v40
  %vm43 = vcmask 130048
  %v44 = vsel %vm43, %v41, 0.0
  %45 = vadd.xlane.f32.xlu0 %v44
  %v46 = vpop.xlane.xlu0 %45
  %v47 = vsel %vm43, %v42, 0.0
  %48 = vadd.xlane.f32.xlu0 %v47
  %v49 = vpop.xlane.xlu0 %48
  %v50 = vsub.f32 0.0, %v46
  %v51 = vsub.f32 0.0, %v49
  %v52 = vmul.f32 %v50, 1.442695
  %v53 = vpow.pop %v52
  %v54 = vmul.f32 %v51, 1.442695
  %v55 = vpow.pop %v54
  %v56 = vadd.f32 %v53, 1.0
  %v57 = vadd.f32 %v55, 1.0
  %v58 = vrcp.pop %v56
  %v59 = vmul.f32 1.0, %v58
  %v60 = vrcp.pop %v57
  %v61 = vmul.f32 1.0, %v60
  %v62 = vmul.f32 %v59, %v16
  %v63 = vmul.f32 %v61, %v17
  %v64 = vsub.f32 1.0, %v59
  %v65 = vsub.f32 1.0, %v61
  %v66 = vmul.f32 %v64, %v14
  %v67 = vmul.f32 %v65, %v15
  %v68 = vadd.f32 %v62, %v66
  %v69 = vadd.f32 %v63, %v67
  %vm70 = vcmp.gt.f32.partialorder %v68, 0.0
  %vm71 = vcmp.gt.f32.partialorder %v69, 0.0
  %v72 = vmin.f32 %v68, 0.0
  %v73 = vmin.f32 %v69, 0.0
  %v74 = vmul.f32 %v72, 1.442695
  %v75 = vpow.pop %v74
  %v76 = vmul.f32 %v73, 1.442695
  %v77 = vpow.pop %v76
  %v78 = vsub.f32 %v75, 1.0
  %v79 = vsub.f32 %v77, 1.0
  %v80 = vsel %vm70, %v68, %v78
  %v81 = vsel %vm71, %v69, %v79
  %82 = vst.msk [vmem:[%s3] sm:$0xff] %vm43, %v80
  %83 = vst.msk [vmem:[%s3 + $0x8] sm:$0xff] %vm43, %v81
  // Predicated region
  $region14: #{trans_img2_forward.62} parent=0 // pred_check
    _
  $region15: #{trans_img2_forward.62} parent=0 // pred_check_branch
    %85 = sbr.rel (0) target = $region17
  $region16: #{trans_img2_forward.62} parent=0 // pred_region
    _
  $region17: #{trans_img2_forward.62} parent=0 // pred_fallthru
    _
  // Predicated region
  $region18: #{trans_img2_forward.62} parent=0 // pred_check
    _
  $region19: #{trans_img2_forward.62} parent=0 // pred_check_branch
    %87 = sbr.rel (0) target = $region21
  $region20: #{trans_img2_forward.62} parent=0 // pred_region
    _
  $region21: #{trans_img2_forward.62} parent=0 // pred_fallthru
    _

// kernel: trans_img2_forward.63
$region0: #{trans_img2_forward.63}
  #allocation0 [shape = 'u32[]', space=smem, size = 0x4, offset = 0x4, fixed_abs, tag = 'smem constant byte address 0x4 - core index']
  #allocation1 [shape = 'u32[144,128]{1,0:T(1,128)}', space=vmem, size = 0x12000, scoped, tag = 'internal scratch']
  %s0 = inlined_call_operand.vmem [shape: f32[16,16], index: 0, kind: input, shape index: {}]
  %s1 = inlined_call_operand.vmem [shape: f32[16,64], index: 1, kind: input, shape index: {}]
  %s2 = inlined_call_operand.vmem [shape: f32[1,64], index: 2, kind: input, shape index: {}]
  %s3 = inlined_call_operand.vmem [shape: f32[16,64], index: 3, kind: output, shape index: {}]
  %s4 = sld [smem:[#allocation0]]
  $region22: #{trans_img2_forward.63} parent=0
    _
  %s6 = ssub.s32 1, %s4
  %s7 = scalar_select 0, %s6, %s4
  // Predicated region
  $region2: #{trans_img2_forward.63} parent=0 // pred_check
    _
  $region3: #{trans_img2_forward.63} parent=0 // pred_check_branch
    %9 = sbr.rel (0) target = $region5
  $region4: #{trans_img2_forward.63} parent=0 // pred_region
    _
  $region5: #{trans_img2_forward.63} parent=0 // pred_fallthru
    _
  // Predicated region
  $region6: #{trans_img2_forward.63} parent=0 // pred_check
    _
  $region7: #{trans_img2_forward.63} parent=0 // pred_check_branch
    %11 = sbr.rel (0) target = $region9
  $region8: #{trans_img2_forward.63} parent=0 // pred_region
    _
  $region9: #{trans_img2_forward.63} parent=0 // pred_fallthru
    _
  // Predicated region
  $region10: #{trans_img2_forward.63} parent=0 // pred_check
    _
  $region11: #{trans_img2_forward.63} parent=0 // pred_check_branch
    %13 = sbr.rel (0) target = $region13
  $region12: #{trans_img2_forward.63} parent=0 // pred_region
    _
  $region13: #{trans_img2_forward.63} parent=0 // pred_fallthru
    _
  %v14 = vld [vmem:[%s0] sm:$0xff]
  %v15 = vld [vmem:[%s0 + $0x8] sm:$0xff]
  %v16 = vld [vmem:[%s1] sm:$0xff]
  %v17 = vld [vmem:[%s1 + $0x8] sm:$0xff]
  %v18 = vld [vmem:[%s2] sm:$0x1]
  %v20 = vlaneseq
  %v21 = vshrl.u32 %v20, 7
  %v22 = vsub.s32 0, %v21
  %v23 = vrot.slane %v18, %v22
  %vm25 = vcmask 130048
  %v27 = vsel %vm25, %v14, 0
  %v30 = vsel %vm25, %v15, 0
  %32 = vmatprep.subr.mxu0 0.0
  %33 = vmatpush1.msra.mxu0 %v16
  %34 = vmatprep.subr.mxu0 0.0
  %35 = vmatpush1.msra.mxu0 %v17
  %36 = vmatprep.subr.mxu0 0.0
  %37 = vmatpush1.msra.mxu0 0.0
  %38 = vmatprep.subr.mxu0 0.0
  %39 = vmatpush1.msra.mxu0 0.0
  %40 = vmatprep.subr.mxu0 0.0
  %41 = vmatpush1.msra.mxu0 0.0
  %42 = vmatprep.subr.mxu0 0.0
  %43 = vmatpush1.msra.mxu0 0.0
  %44 = vmatprep.subr.mxu0 0.0
  %45 = vmatpush1.msra.mxu0 0.0
  %46 = vmatprep.subr.mxu0 0.0
  %47 = vmatpush1.msra.mxu0 0.0
  %48 = vmatprep.subr.mxu0 0.0
  %49 = vmatpush1.msra.mxu0 0.0
  %50 = vmatprep.subr.mxu0 0.0
  %51 = vmatpush1.msra.mxu0 0.0
  %52 = vmatprep.subr.mxu0 0.0
  %53 = vmatpush1.msra.mxu0 0.0
  %54 = vmatprep.subr.mxu0 0.0
  %55 = vmatpush1.msra.mxu0 0.0
  %56 = vmatprep.subr.mxu0 0.0
  %57 = vmatpush1.msra.mxu0 0.0
  %58 = vmatprep.subr.mxu0 0.0
  %59 = vmatpush1.msra.mxu0 0.0
  %60 = vmatprep.subr.mxu0 0.0
  %61 = vmatpush1.msra.mxu0 0.0
  %62 = vmatprep.subr.mxu0 0.0
  %63 = vmatpush1.msra.mxu0 0.0
  %64 = vmatprep.subr.mxu0 0.0
  %65 = vmatpush1.msra.mxu0 0.0
  %66 = vmatprep.subr.mxu0 0.0
  %67 = vmatpush1.msra.mxu0 0.0
  %68 = vmatprep.subr.mxu0 0.0
  %69 = vmatpush1.msra.mxu0 0.0
  %70 = vmatprep.subr.mxu0 0.0
  %71 = vmatpush1.msra.mxu0 0.0
  %72 = vmatprep.subr.mxu0 0.0
  %73 = vmatpush1.msra.mxu0 0.0
  %74 = vmatprep.subr.mxu0 0.0
  %75 = vmatpush1.msra.mxu0 0.0
  %76 = vmatprep.subr.mxu0 0.0
  %77 = vmatpush1.msra.mxu0 0.0
  %78 = vmatprep.subr.mxu0 0.0
  %79 = vmatpush1.msra.mxu0 0.0
  %80 = vmatprep.subr.mxu0 0.0
  %81 = vmatpush1.msra.mxu0 0.0
  %82 = vmatprep.subr.mxu0 0.0
  %83 = vmatpush1.msra.mxu0 0.0
  %84 = vmatprep.subr.mxu0 0.0
  %85 = vmatpush1.msra.mxu0 0.0
  %86 = vmatprep.subr.mxu0 0.0
  %87 = vmatpush1.msra.mxu0 0.0
  %88 = vmatprep.subr.mxu0 0.0
  %89 = vmatpush1.msra.mxu0 0.0
  %90 = vmatprep.subr.mxu0 0.0
  %91 = vmatpush1.msra.mxu0 0.0
  %92 = vmatprep.subr.mxu0 0.0
  %93 = vmatpush1.msra.mxu0 0.0
  %94 = vmatprep.subr.mxu0 0.0
  %95 = vmatpush1.msra.mxu0 0.0
  %96 = vmatprep.mubr.f32.mxu0 0.0
  %97 = vmatmul.mubr.f32.gmra.mrb[0].mxu0 %v27
  %v98 = vpop.f32.mrb[0].mxu0
  %v99 = vadd.f32 %v23, %v98
  %v100 = vpop.f32.mrb[0].mxu0
  %101 = vmatprep.mubr.f32.mxu0 0.0
  %102 = vmatmul.mubr.f32.gmra.mrb[0].mxu0 %v30
  %v103 = vpop.f32.mrb[0].mxu0
  %v104 = vadd.f32 %v23, %v103
  %v105 = vpop.f32.mrb[0].mxu0
  %106 = vdwg.mxu0
  %vm107 = vcmask 523264
  %108 = vst.msk [vmem:[%s3] sm:$0xff] %vm107, %v99
  %109 = vst.msk [vmem:[%s3 + $0x8] sm:$0xff] %vm107, %v104
  // Predicated region
  $region14: #{trans_img2_forward.63} parent=0 // pred_check
    _
  $region15: #{trans_img2_forward.63} parent=0 // pred_check_branch
    %111 = sbr.rel (0) target = $region17
  $region16: #{trans_img2_forward.63} parent=0 // pred_region
    _
  $region17: #{trans_img2_forward.63} parent=0 // pred_fallthru
    _
  // Predicated region
  $region18: #{trans_img2_forward.63} parent=0 // pred_check
    _
  $region19: #{trans_img2_forward.63} parent=0 // pred_check_branch
    %113 = sbr.rel (0) target = $region21
  $region20: #{trans_img2_forward.63} parent=0 // pred_region
    _
  $region21: #{trans_img2_forward.63} parent=0 // pred_fallthru
    _

// kernel: trans_img2_forward.71
$region0: #{trans_img2_forward.71}
  #allocation0 [shape = 'u32[]', space=smem, size = 0x4, offset = 0x4, fixed_abs, tag = 'smem constant byte address 0x4 - core index']
  #allocation1 [shape = 'u32[144,128]{1,0:T(1,128)}', space=vmem, size = 0x12000, scoped, tag = 'internal scratch']
  %s0 = inlined_call_operand.vmem [shape: f32[16,32], index: 0, kind: input, shape index: {}]
  %s1 = inlined_call_operand.vmem [shape: f32[16,32], index: 1, kind: input, shape index: {}]
  %s2 = inlined_call_operand.vmem [shape: f32[3,32], index: 2, kind: input, shape index: {}]
  %s3 = inlined_call_operand.hbm [shape: f32[16,32], index: 3, kind: output, shape index: {}]
  %s4 = sld [smem:[#allocation0]]
  $region22: #{trans_img2_forward.71} parent=0
    _
  %s6 = ssub.s32 1, %s4
  %s7 = scalar_select 0, %s6, %s4
  $region1: #{trans_img2_forward.71} parent=0
    #allocation2 [shape = 'u8[8192]{0}', space=vmem, size = 0x2000, scoped, tag = 'output window, operand 0, single buffered']
    #allocation3 [shape = 's32[1]{0}', space=sflag, size = 0x4, scoped, tag = 'scoped memory for trans_img2_forward.71']
    %8 = vsyncpa [#allocation3], 0
    // Predicated region
    $region2: #{trans_img2_forward.71} parent=1 // pred_check
      _
    $region3: #{trans_img2_forward.71} parent=1 // pred_check_branch
      %10 = sbr.rel (0) target = $region5
    $region4: #{trans_img2_forward.71} parent=1 // pred_region
      _
    $region5: #{trans_img2_forward.71} parent=1 // pred_fallthru
      _
    // Predicated region
    $region6: #{trans_img2_forward.71} parent=1 // pred_check
      _
    $region7: #{trans_img2_forward.71} parent=1 // pred_check_branch
      %12 = sbr.rel (0) target = $region9
    $region8: #{trans_img2_forward.71} parent=1 // pred_region
      _
    $region9: #{trans_img2_forward.71} parent=1 // pred_fallthru
      _
    // Predicated region
    $region10: #{trans_img2_forward.71} parent=1 // pred_check
      _
    $region11: #{trans_img2_forward.71} parent=1 // pred_check_branch
      %14 = sbr.rel (0) target = $region13
    $region12: #{trans_img2_forward.71} parent=1 // pred_region
      _
    $region13: #{trans_img2_forward.71} parent=1 // pred_fallthru
      _
    %v15 = vld [vmem:[%s0] sm:$0xff]
    %v16 = vld [vmem:[%s0 + $0x8] sm:$0xff]
    %v17 = vld [vmem:[%s1] sm:$0xff]
    %v18 = vld [vmem:[%s1 + $0x8] sm:$0xff]
    %v19 = vld [vmem:[%s2] sm:$0x7]
    %v20 = vlaneseq
    %v21 = vshrl.u32 %v20, 7
    %v22 = vsub.s32 0, %v21
    %v23 = vrot.slane %v19, %v22
    %v24 = vmul.f32 %v15, %v23
    %v25 = vmul.f32 %v16, %v23
    %v26 = vlaneseq
    %v27 = vshrl.u32 %v26, 7
    %v28 = vsub.s32 1, %v27
    %v29 = vrot.slane %v19, %v28
    %v30 = vmul.f32 %v17, %v29
    %v31 = vmul.f32 %v18, %v29
    %v32 = vadd.f32 %v24, %v30
    %v33 = vadd.f32 %v25, %v31
    %v34 = vsub.f32 %v15, %v17
    %v35 = vsub.f32 %v16, %v18
    %v36 = vlaneseq
    %v37 = vshrl.u32 %v36, 7
    %v38 = vsub.s32 2, %v37
    %v39 = vrot.slane %v19, %v38
    %v40 = vmul.f32 %v34, %v39
    %v41 = vmul.f32 %v35, %v39
    %v42 = vadd.f32 %v32, %v40
    %v43 = vadd.f32 %v33, %v41
    %vm44 = vcmask 261120
    %v45 = vsel %vm44, %v42, 0.0
    %46 = vadd.xlane.f32.xlu0 %v45
    %v47 = vpop.xlane.xlu0 %46
    %v48 = vsel %vm44, %v43, 0.0
    %49 = vadd.xlane.f32.xlu0 %v48
    %v50 = vpop.xlane.xlu0 %49
    %v51 = vsub.f32 0.0, %v47
    %v52 = vsub.f32 0.0, %v50
    %v53 = vmul.f32 %v51, 1.442695
    %v54 = vpow.pop %v53
    %v55 = vmul.f32 %v52, 1.442695
    %v56 = vpow.pop %v55
    %v57 = vadd.f32 %v54, 1.0
    %v58 = vadd.f32 %v56, 1.0
    %v59 = vrcp.pop %v57
    %v60 = vmul.f32 1.0, %v59
    %v61 = vrcp.pop %v58
    %v62 = vmul.f32 1.0, %v61
    %v63 = vmul.f32 %v60, %v17
    %v64 = vmul.f32 %v62, %v18
    %v65 = vsub.f32 1.0, %v60
    %v66 = vsub.f32 1.0, %v62
    %v67 = vmul.f32 %v65, %v15
    %v68 = vmul.f32 %v66, %v16
    %v69 = vadd.f32 %v63, %v67
    %v70 = vadd.f32 %v64, %v68
    %71 = vst.msk [vmem:[#allocation2] sm:$0xff] %vm44, %v69
    %72 = vst.msk [vmem:[#allocation2 + $0x8] sm:$0xff] %vm44, %v70
    // Predicated region
    $region14: #{trans_img2_forward.71} parent=1 // pred_check
      _
    $region15: #{trans_img2_forward.71} parent=1 // pred_check_branch
      %74 = sbr.rel (0) target = $region17
    $region16: #{trans_img2_forward.71} parent=1 // pred_region
      %s76 = ssub.s32 256, 256
      %77 = vsyncadd [#allocation3], %s76
      %s78 = sshll.u32 [#allocation2], 4
      %s79 = int_to_ptr.vmem [resolvable:$true] %s78
      %84 = dma.vmem_to_hbm [thread:$0]  %s79, 256, %s3, [#allocation3], 128, 128, 8
    $region17: #{trans_img2_forward.71} parent=1 // pred_fallthru
      _
    // Predicated region
    $region18: #{trans_img2_forward.71} parent=1 // pred_check
      _
    $region19: #{trans_img2_forward.71} parent=1 // pred_check_branch
      %86 = sbr.rel (0) target = $region21
    $region20: #{trans_img2_forward.71} parent=1 // pred_region
      %87 = dma.done [#allocation3], 256
    $region21: #{trans_img2_forward.71} parent=1 // pred_fallthru
      _
    %88 = vsyncpa [#allocation3], 1

</llo_original>
